<compile_context>
chip_gen: v6e
topology: v6e:2x2x1
jax: 0.10.0
libtpu: 0.0.40
codegen_flags: <defaults>
</compile_context>

<pallas_src>
import functools

import numpy as np
import jax
import jax.numpy as jnp
from jax.experimental import pallas as pl
from jax.experimental.pallas import tpu as pltpu


def _round_up(v, m):
    return (v + m - 1) // m * m


def _ir_bottleneck_kernel(x_ref, w1, b1, w2, b2, w3, b3, wse1, wse2,
                          masks, pool, alphas, o_ref, *, W, fuse_k):
    x = x_ref[0]                                     # (Cin, Lp) f32
    a1 = alphas[0]
    a2 = alphas[1]
    a3 = alphas[2]

    # BN0 + conv1x1 #1 + BN1 (folded into w1/b1) + PReLU.
    # bf16 MXU operands, f32 accumulation.
    h = jnp.dot(w1[...], x.astype(jnp.bfloat16),
                preferred_element_type=jnp.float32) + b1[...]
    h = jnp.where(h >= 0, h, a1 * h)                 # (P, Lp) f32

    # conv3x3 (stride=1, pad=1): 9 lane-rolls (XLU) + precomputed border
    # masks (host-built, applied as a broadcast (1, Lp) multiply).
    P, Lp = h.shape
    m = masks[...]                                   # (9, Lp) f32 0/1
    taps = []
    k = 0
    for dy in (-1, 0, 1):
        for dx in (-1, 0, 1):
            # lane (y, x) sees h at (y+dy, x+dx); wrap-around / padding spill
            # is zeroed by the precomputed mask.
            shift = (-(dy * W + dx)) % Lp
            t = h if shift == 0 else pltpu.roll(h, shift, 1)
            taps.append(t * m[k:k + 1, :])
            k += 1

    if fuse_k:
        # small P: one K=9P MXU matmul.
        stacked = jnp.concatenate(taps, axis=0).astype(jnp.bfloat16)   # (9P, Lp)
        h = jnp.dot(w2[...], stacked, preferred_element_type=jnp.float32)
    else:
        # large P: accumulate nine K=P matmuls; never materialize (9P, Lp).
        h = jnp.dot(w2[0], taps[0].astype(jnp.bfloat16),
                    preferred_element_type=jnp.float32)
        for t in range(1, 9):
            h = h + jnp.dot(w2[t], taps[t].astype(jnp.bfloat16),
                            preferred_element_type=jnp.float32)
    h = h + b2[...]
    h = jnp.where(h >= 0, h, a2 * h)                 # (P, Lp) f32

    # conv1x1 #3 + BN3 (folded)
    h = jnp.dot(w3[...], h.astype(jnp.bfloat16),
                preferred_element_type=jnp.float32) + b3[...]           # (C4, Lp)

    # SE block: masked global average pool over valid lanes, two tiny FCs,
    # sigmoid gate broadcast back over lanes.
    gap = jnp.sum(h * pool[...], axis=1, keepdims=True)                 # (C4, 1)
    s = jnp.dot(wse1[...], gap.astype(jnp.bfloat16),
                preferred_element_type=jnp.float32)                     # (Cr, 1)
    s = jnp.maximum(s, 0.0)
    s = jnp.dot(wse2[...], s.astype(jnp.bfloat16),
                preferred_element_type=jnp.float32)                     # (C4, 1)
    s = jax.nn.sigmoid(s)
    h = h * s

    # residual (downsample is None -> Cin == C4) + final PReLU, all f32.
    h = h + x
    o_ref[0] = jnp.where(h >= 0, h, a3 * h)


def ir_bottleneck_forward(x_nchw, params, alphas, *, k_fuse_max=256):
    """IR_Bottleneck forward (stride=1, downsample=None, use_se=True, eval BN)."""
    N, Cin, H, W = x_nchw.shape
    HW = H * W
    HWp = _round_up(HW, 128)                 # lane-dense tiles / unmasked stores
    P0 = params["w1"].shape[0]
    P = _round_up(P0, 8)                     # sublane-aligned taps / K=9P matmul
    C4 = params["w3"].shape[0]
    Cr0 = params["wse1"].shape[0]
    Crp = _round_up(Cr0, 8)
    assert Cin == C4, "downsample is None -> residual channels must match"

    fuse_k = (9 * P) <= k_fuse_max           # use 128 for v5e, 256 for v6e/v7x

    f32 = lambda v: jnp.asarray(v, jnp.float32)
    bf16 = lambda v: jnp.asarray(v, jnp.bfloat16)

    # ---- fold BN (eval mode) into conv weights; pad P / Cr to sublane tiles --
    w1 = f32(params["w1"])                                            # (P0, Cin)
    w1f = w1 * f32(params["bn0_s"])[None, :] * f32(params["bn1_s"])[:, None]
    b1f = (w1 @ f32(params["bn0_b"])) * f32(params["bn1_s"]) + f32(params["bn1_b"])
    w1f = jnp.pad(w1f, ((0, P - P0), (0, 0)))
    b1f = jnp.pad(b1f, (0, P - P0))

    w2 = jnp.pad(f32(params["w2"]), ((0, P - P0), (0, P - P0), (0, 0), (0, 0)))
    bn2_s = jnp.pad(f32(params["bn2_s"]), (0, P - P0))
    b2f = jnp.pad(f32(params["bn2_b"]), (0, P - P0))
    if fuse_k:
        # (P, P, 3, 3) -> (P, 9P); columns ordered (kh, kw, cin) to match taps.
        w2f = jnp.transpose(w2, (0, 2, 3, 1)).reshape(P, 9 * P) * bn2_s[:, None]
    else:
        # (P, P, 3, 3) -> (9, P, P); tap-major so w2[k] is a clean (P, P) slab.
        w2f = jnp.transpose(w2, (2, 3, 0, 1)).reshape(9, P, P) * bn2_s[None, :, None]

    w3f = jnp.pad(f32(params["w3"]), ((0, 0), (0, P - P0))) * f32(params["bn3_s"])[:, None]
    b3f = f32(params["bn3_b"])

    wse1 = jnp.pad(f32(params["wse1"]), ((0, Crp - Cr0), (0, 0)))
    wse2 = jnp.pad(f32(params["wse2"]), ((0, 0), (0, Crp - Cr0)))

    # ---- precomputed 3x3 border masks + pooling mask (host, built once) -----
    lane = np.arange(HWp)
    valid = lane < HW
    col = lane % W
    row = lane // W
    masks_np = np.zeros((9, HWp), np.float32)
    k = 0
    for dy in (-1, 0, 1):
        for dx in (-1, 0, 1):
            ok = valid.copy()
            if dy == -1:
                ok &= row >= 1
            if dy == 1:
                ok &= row <= H - 2
            if dx == -1:
                ok &= col >= 1
            if dx == 1:
                ok &= col <= W - 2
            masks_np[k] = ok
            k += 1
    masks = jnp.asarray(masks_np, jnp.float32)
    pool = jnp.asarray((valid.astype(np.float32) / float(HW)).reshape(1, HWp),
                       jnp.float32)

    colv = lambda v: v.reshape(-1, 1)
    vmem_params = [
        bf16(w1f), colv(b1f), bf16(w2f), colv(b2f), bf16(w3f), colv(b3f),
        bf16(wse1), bf16(wse2), masks, pool,
    ]

    # ---- activations: free reshape NCHW -> NC(HW), zero lane-pad if needed --
    x2 = x_nchw.reshape(N, Cin, HW).astype(jnp.float32)
    if HWp != HW:
        x2 = jnp.pad(x2, ((0, 0), (0, 0), (0, HWp - HW)))

    if N >= 3:
        x_spec = pl.BlockSpec((1, Cin, HWp), lambda n: (n, 0, 0),
                              pipeline_mode=pl.Buffered(3))
    else:
        x_spec = pl.BlockSpec((1, Cin, HWp), lambda n: (n, 0, 0))
    in_specs = (
        [x_spec]
        + [pl.BlockSpec(a.shape, lambda n, nd=a.ndim: (0,) * nd) for a in vmem_params]
        + [pl.BlockSpec(memory_space=pltpu.MemorySpace.SMEM)]
    )

    # advisory cost estimate (weights counted once; matmul MACs dominate)
    weight_bytes = sum(int(np.prod(a.shape)) * a.dtype.itemsize for a in vmem_params)
    macs = N * HWp * (P * Cin + 9 * P * P + C4 * P) + N * (Crp * C4 + C4 * Crp)
    cost = pl.CostEstimate(
        flops=int(2 * macs),
        transcendentals=int(N * C4),
        bytes_accessed=int(4 * N * (Cin + C4) * HWp + weight_bytes),
    )

    # explicit VMEM budget only when the working set outgrows the scoped default
    est = (4 * HWp * (2 * Cin + 2 * C4)                     # double-buffered x / out
           + 4 * HWp * (Cin + 2 * P + C4)                   # f32 temps (x_bf src, h, h3)
           + 4 * HWp * (9 * P if fuse_k else 2 * P)         # f32 taps live set
           + 2 * HWp * (9 * P if fuse_k else P)             # bf16 matmul operand
           + weight_bytes)
    vmem_limit = None
    if est > (12 << 20):
        vmem_limit = min(int(est * 1.5), 64 << 20)          # v7x physical = 64 MiB/TC

    kernel = functools.partial(_ir_bottleneck_kernel, W=W, fuse_k=fuse_k)
    out = pl.pallas_call(
        kernel,
        out_shape=jax.ShapeDtypeStruct((N, C4, HWp), jnp.float32),
        grid_spec=pltpu.PrefetchScalarGridSpec(
            num_scalar_prefetch=0,
            grid=(N,),
            in_specs=in_specs,
            out_specs=pl.BlockSpec((1, C4, HWp), lambda n: (n, 0, 0)),
        ),
        compiler_params=pltpu.CompilerParams(
            dimension_semantics=("parallel",),
            vmem_limit_bytes=vmem_limit),
        cost_estimate=cost,
    )(x2, *vmem_params, jnp.asarray(alphas, jnp.float32))

    if HWp != HW:
        out = out[:, :, :HW]
    return out.reshape(N, C4, H, W)


def _prelu(x, a):
    return jnp.where(x >= 0, x, a * x)


def ref_forward(x, p, alphas):
    """Pure-JAX reference of IR_Bottleneck (eval-mode BN, stride=1, use_se)."""
    def bn(h, s, b):
        return h * s[None, :, None, None] + b[None, :, None, None]
    h = bn(x, p["bn0_s"], p["bn0_b"])
    h = jnp.einsum("oi,nihw->nohw", p["w1"], h)
    h = _prelu(bn(h, p["bn1_s"], p["bn1_b"]), alphas[0])
    h = jax.lax.conv_general_dilated(
        h, p["w2"], window_strides=(1, 1), padding=((1, 1), (1, 1)),
        dimension_numbers=("NCHW", "OIHW", "NCHW"))
    h = _prelu(bn(h, p["bn2_s"], p["bn2_b"]), alphas[1])
    h = jnp.einsum("oi,nihw->nohw", p["w3"], h)
    h = bn(h, p["bn3_s"], p["bn3_b"])
    gap = jnp.mean(h, axis=(2, 3), keepdims=True)
    s = jnp.maximum(jnp.einsum("oi,nihw->nohw", p["wse1"], gap), 0.0)
    s = jax.nn.sigmoid(jnp.einsum("oi,nihw->nohw", p["wse2"], s))
    h = h * s
    h = h + x
    return _prelu(h, alphas[2])


def make_params(key, inplanes, planes, reduction=16):
    C4 = planes * 4
    Cr = max(C4 // reduction, 1)
    keys = iter(jax.random.split(key, 32))

    def bn_params(c):
        gamma = jax.random.uniform(next(keys), (c,), minval=0.5, maxval=1.5)
        beta = 0.1 * jax.random.normal(next(keys), (c,))
        mean = 0.1 * jax.random.normal(next(keys), (c,))
        var = jax.random.uniform(next(keys), (c,), minval=0.5, maxval=1.5)
        scale = gamma / jnp.sqrt(var + 1e-5)
        return scale.astype(jnp.float32), (beta - mean * scale).astype(jnp.float32)

    p = {}
    p["bn0_s"], p["bn0_b"] = bn_params(inplanes)
    p["w1"] = 0.1 * jax.random.normal(next(keys), (planes, inplanes), dtype=jnp.float32)
    p["bn1_s"], p["bn1_b"] = bn_params(planes)
    p["w2"] = 0.1 * jax.random.normal(next(keys), (planes, planes, 3, 3), dtype=jnp.float32)
    p["bn2_s"], p["bn2_b"] = bn_params(planes)
    p["w3"] = 0.1 * jax.random.normal(next(keys), (C4, planes), dtype=jnp.float32)
    p["bn3_s"], p["bn3_b"] = bn_params(C4)
    p["wse1"] = 0.1 * jax.random.normal(next(keys), (Cr, C4), dtype=jnp.float32)
    p["wse2"] = 0.1 * jax.random.normal(next(keys), (C4, Cr), dtype=jnp.float32)
    return p


if __name__ == "__main__":
    key = jax.random.PRNGKey(0)
    k_params, k_x1, k_x2 = jax.random.split(key, 3)

    planes = 8
    C4 = planes * 4            # expansion = 4
    inplanes = C4              # downsample is None -> must match for residual
    params = make_params(k_params, inplanes, planes, reduction=16)
    # three independent PReLU modules (distinct slopes to exercise indexing)
    alphas = jnp.array([0.25, 0.15, 0.35], jnp.float32)

    # tolerance 2e-2: MXU operands are bf16 (f32 accumulation); residual /
    # PReLU / SE gate stay in f32.
    tol = dict(rtol=2e-2, atol=2e-2)

    # Case 1: HW = 256 (multiple of 128) -> no padding, fused K=9P matmul,
    # two "parallel" grid steps (both v7x TensorCores busy, pipelined I/O).
    x = jax.random.normal(k_x1, (2, inplanes, 16, 16), dtype=jnp.float32)
    out = jax.block_until_ready(ir_bottleneck_forward(x, params, alphas))
    ref = ref_forward(x, params, alphas)
    np.testing.assert_allclose(np.asarray(out), np.asarray(ref), **tol)

    # Case 2: HW = 64 -> lane-padded to 128; force the per-tap accumulate
    # path (the large-P variant that never materializes the (9P, L) slab).
    x_small = jax.random.normal(k_x2, (2, inplanes, 8, 8), dtype=jnp.float32)
    out_small = jax.block_until_ready(
        ir_bottleneck_forward(x_small, params, alphas, k_fuse_max=0))
    ref_small = ref_forward(x_small, params, alphas)
    np.testing.assert_allclose(np.asarray(out_small), np.asarray(ref_small), **tol)

    print("KERNEL_OK")
</pallas_src>

<mosaic_0001>
module attributes {stable_mosaic.version = 11 : i64} {
  func.func @_ir_bottleneck_kernel(%arg0: i32, %arg1: memref<1x32x256xf32, #tpu.memory_space<vmem>>, %arg2: memref<8x32xbf16, #tpu.memory_space<vmem>>, %arg3: memref<8x1xf32, #tpu.memory_space<vmem>>, %arg4: memref<8x72xbf16, #tpu.memory_space<vmem>>, %arg5: memref<8x1xf32, #tpu.memory_space<vmem>>, %arg6: memref<32x8xbf16, #tpu.memory_space<vmem>>, %arg7: memref<32x1xf32, #tpu.memory_space<vmem>>, %arg8: memref<8x32xbf16, #tpu.memory_space<vmem>>, %arg9: memref<32x8xbf16, #tpu.memory_space<vmem>>, %arg10: memref<9x256xf32, #tpu.memory_space<vmem>>, %arg11: memref<1x256xf32, #tpu.memory_space<vmem>>, %arg12: memref<3xf32, #tpu.memory_space<smem>>, %arg13: memref<1x32x256xf32, #tpu.memory_space<vmem>>) attributes {dimension_semantics = [#tpu.dimension_semantics<parallel>], iteration_bounds = array<i64: 2>, scalar_prefetch = 0 : i64, scratch_operands = 0 : i64, tpu.core_type = #tpu.core_type<tc>, window_params = [{transform_indices = @transform_0, window_bounds = array<i64: 1, 32, 256>}, {pipeline_mode = #tpu.pipeline_mode<synchronous>, transform_indices = @transform_1, window_bounds = array<i64: 8, 32>}, {pipeline_mode = #tpu.pipeline_mode<synchronous>, transform_indices = @transform_2, window_bounds = array<i64: 8, 1>}, {pipeline_mode = #tpu.pipeline_mode<synchronous>, transform_indices = @transform_3, window_bounds = array<i64: 8, 72>}, {pipeline_mode = #tpu.pipeline_mode<synchronous>, transform_indices = @transform_4, window_bounds = array<i64: 8, 1>}, {pipeline_mode = #tpu.pipeline_mode<synchronous>, transform_indices = @transform_5, window_bounds = array<i64: 32, 8>}, {pipeline_mode = #tpu.pipeline_mode<synchronous>, transform_indices = @transform_6, window_bounds = array<i64: 32, 1>}, {pipeline_mode = #tpu.pipeline_mode<synchronous>, transform_indices = @transform_7, window_bounds = array<i64: 8, 32>}, {pipeline_mode = #tpu.pipeline_mode<synchronous>, transform_indices = @transform_8, window_bounds = array<i64: 32, 8>}, {pipeline_mode = #tpu.pipeline_mode<synchronous>, transform_indices = @transform_9, window_bounds = array<i64: 9, 256>}, {pipeline_mode = #tpu.pipeline_mode<synchronous>, transform_indices = @transform_10, window_bounds = array<i64: 1, 256>}, {transform_indices = @transform_11, window_bounds = array<i64: 3>}, {transform_indices = @transform_12, window_bounds = array<i64: 1, 32, 256>}]} {
    %c0 = arith.constant 0 : index
    %c0_0 = arith.constant 0 : index
    %c0_1 = arith.constant 0 : index
    %0 = vector.load %arg1[%c0, %c0_0, %c0_1] : memref<1x32x256xf32, #tpu.memory_space<vmem>>, vector<1x32x256xf32>
    %1 = vector.shape_cast %0 : vector<1x32x256xf32> to vector<32x256xf32>
    %c0_2 = arith.constant 0 : index
    %2 = memref.load %arg12[%c0_2] : memref<3xf32, #tpu.memory_space<smem>>
    %c1 = arith.constant 1 : index
    %3 = memref.load %arg12[%c1] : memref<3xf32, #tpu.memory_space<smem>>
    %c2 = arith.constant 2 : index
    %4 = memref.load %arg12[%c2] : memref<3xf32, #tpu.memory_space<smem>>
    %c0_3 = arith.constant 0 : index
    %c0_4 = arith.constant 0 : index
    %5 = vector.load %arg2[%c0_3, %c0_4] : memref<8x32xbf16, #tpu.memory_space<vmem>>, vector<8x32xbf16>
    %6 = arith.truncf %1 : vector<32x256xf32> to vector<32x256xbf16>
    %cst = arith.constant dense<0.000000e+00> : vector<8x256xf32>
    %7 = tpu.matmul %5, %6, %cst {dimension_numbers = #tpu.dot_dimension_numbers<[1], [0], [0], [1], [0, 0, 1, 1], [], []>} : vector<8x32xbf16>, vector<32x256xbf16>, vector<8x256xf32> -> vector<8x256xf32>
    %c0_5 = arith.constant 0 : index
    %c0_6 = arith.constant 0 : index
    %8 = vector.load %arg3[%c0_5, %c0_6] : memref<8x1xf32, #tpu.memory_space<vmem>>, vector<8x1xf32>
    %9 = vector.broadcast %8 : vector<8x1xf32> to vector<8x256xf32>
    %10 = arith.addf %7, %9 : vector<8x256xf32>
    %cst_7 = arith.constant 0.000000e+00 : f32
    %11 = vector.broadcast %cst_7 : f32 to vector<8x256xf32>
    %12 = arith.cmpf oge, %10, %11 : vector<8x256xf32>
    %13 = vector.broadcast %2 : f32 to vector<8x256xf32>
    %14 = arith.mulf %13, %10 : vector<8x256xf32>
    %15 = arith.select %12, %10, %14 : vector<8x256xi1>, vector<8x256xf32>
    %c0_8 = arith.constant 0 : index
    %c0_9 = arith.constant 0 : index
    %16 = vector.load %arg10[%c0_8, %c0_9] : memref<9x256xf32, #tpu.memory_space<vmem>>, vector<9x256xf32>
    %c17_i32 = arith.constant 17 : i32
    %17 = tpu.dynamic_rotate %15 by %c17_i32 dim 1 : vector<8x256xf32>, i32 -> vector<8x256xf32>
    %18 = vector.extract_strided_slice %16 {offsets = [0, 0], sizes = [1, 256], strides = [1, 1]} : vector<9x256xf32> to vector<1x256xf32>
    %19 = vector.broadcast %18 : vector<1x256xf32> to vector<8x256xf32>
    %20 = arith.mulf %17, %19 : vector<8x256xf32>
    %c16_i32 = arith.constant 16 : i32
    %21 = tpu.dynamic_rotate %15 by %c16_i32 dim 1 : vector<8x256xf32>, i32 -> vector<8x256xf32>
    %22 = vector.extract_strided_slice %16 {offsets = [1, 0], sizes = [1, 256], strides = [1, 1]} : vector<9x256xf32> to vector<1x256xf32>
    %23 = vector.broadcast %22 : vector<1x256xf32> to vector<8x256xf32>
    %24 = arith.mulf %21, %23 : vector<8x256xf32>
    %c15_i32 = arith.constant 15 : i32
    %25 = tpu.dynamic_rotate %15 by %c15_i32 dim 1 : vector<8x256xf32>, i32 -> vector<8x256xf32>
    %26 = vector.extract_strided_slice %16 {offsets = [2, 0], sizes = [1, 256], strides = [1, 1]} : vector<9x256xf32> to vector<1x256xf32>
    %27 = vector.broadcast %26 : vector<1x256xf32> to vector<8x256xf32>
    %28 = arith.mulf %25, %27 : vector<8x256xf32>
    %c1_i32 = arith.constant 1 : i32
    %29 = tpu.dynamic_rotate %15 by %c1_i32 dim 1 : vector<8x256xf32>, i32 -> vector<8x256xf32>
    %30 = vector.extract_strided_slice %16 {offsets = [3, 0], sizes = [1, 256], strides = [1, 1]} : vector<9x256xf32> to vector<1x256xf32>
    %31 = vector.broadcast %30 : vector<1x256xf32> to vector<8x256xf32>
    %32 = arith.mulf %29, %31 : vector<8x256xf32>
    %33 = vector.extract_strided_slice %16 {offsets = [4, 0], sizes = [1, 256], strides = [1, 1]} : vector<9x256xf32> to vector<1x256xf32>
    %34 = vector.broadcast %33 : vector<1x256xf32> to vector<8x256xf32>
    %35 = arith.mulf %15, %34 : vector<8x256xf32>
    %c255_i32 = arith.constant 255 : i32
    %36 = tpu.dynamic_rotate %15 by %c255_i32 dim 1 : vector<8x256xf32>, i32 -> vector<8x256xf32>
    %37 = vector.extract_strided_slice %16 {offsets = [5, 0], sizes = [1, 256], strides = [1, 1]} : vector<9x256xf32> to vector<1x256xf32>
    %38 = vector.broadcast %37 : vector<1x256xf32> to vector<8x256xf32>
    %39 = arith.mulf %36, %38 : vector<8x256xf32>
    %c241_i32 = arith.constant 241 : i32
    %40 = tpu.dynamic_rotate %15 by %c241_i32 dim 1 : vector<8x256xf32>, i32 -> vector<8x256xf32>
    %41 = vector.extract_strided_slice %16 {offsets = [6, 0], sizes = [1, 256], strides = [1, 1]} : vector<9x256xf32> to vector<1x256xf32>
    %42 = vector.broadcast %41 : vector<1x256xf32> to vector<8x256xf32>
    %43 = arith.mulf %40, %42 : vector<8x256xf32>
    %c240_i32 = arith.constant 240 : i32
    %44 = tpu.dynamic_rotate %15 by %c240_i32 dim 1 : vector<8x256xf32>, i32 -> vector<8x256xf32>
    %45 = vector.extract_strided_slice %16 {offsets = [7, 0], sizes = [1, 256], strides = [1, 1]} : vector<9x256xf32> to vector<1x256xf32>
    %46 = vector.broadcast %45 : vector<1x256xf32> to vector<8x256xf32>
    %47 = arith.mulf %44, %46 : vector<8x256xf32>
    %c239_i32 = arith.constant 239 : i32
    %48 = tpu.dynamic_rotate %15 by %c239_i32 dim 1 : vector<8x256xf32>, i32 -> vector<8x256xf32>
    %49 = vector.extract_strided_slice %16 {offsets = [8, 0], sizes = [1, 256], strides = [1, 1]} : vector<9x256xf32> to vector<1x256xf32>
    %50 = vector.broadcast %49 : vector<1x256xf32> to vector<8x256xf32>
    %51 = arith.mulf %48, %50 : vector<8x256xf32>
    %52 = tpu.concatenate %20, %24, %28, %32, %35, %39, %43, %47, %51 in 0 : vector<8x256xf32>, vector<8x256xf32>, vector<8x256xf32>, vector<8x256xf32>, vector<8x256xf32>, vector<8x256xf32>, vector<8x256xf32>, vector<8x256xf32>, vector<8x256xf32> -> vector<72x256xf32>
    %53 = arith.truncf %52 : vector<72x256xf32> to vector<72x256xbf16>
    %c0_10 = arith.constant 0 : index
    %c0_11 = arith.constant 0 : index
    %54 = vector.load %arg4[%c0_10, %c0_11] : memref<8x72xbf16, #tpu.memory_space<vmem>>, vector<8x72xbf16>
    %cst_12 = arith.constant dense<0.000000e+00> : vector<8x256xf32>
    %55 = tpu.matmul %54, %53, %cst_12 {dimension_numbers = #tpu.dot_dimension_numbers<[1], [0], [0], [1], [0, 0, 1, 1], [], []>} : vector<8x72xbf16>, vector<72x256xbf16>, vector<8x256xf32> -> vector<8x256xf32>
    %c0_13 = arith.constant 0 : index
    %c0_14 = arith.constant 0 : index
    %56 = vector.load %arg5[%c0_13, %c0_14] : memref<8x1xf32, #tpu.memory_space<vmem>>, vector<8x1xf32>
    %57 = vector.broadcast %56 : vector<8x1xf32> to vector<8x256xf32>
    %58 = arith.addf %55, %57 : vector<8x256xf32>
    %cst_15 = arith.constant 0.000000e+00 : f32
    %59 = vector.broadcast %cst_15 : f32 to vector<8x256xf32>
    %60 = arith.cmpf oge, %58, %59 : vector<8x256xf32>
    %61 = vector.broadcast %3 : f32 to vector<8x256xf32>
    %62 = arith.mulf %61, %58 : vector<8x256xf32>
    %63 = arith.select %60, %58, %62 : vector<8x256xi1>, vector<8x256xf32>
    %c0_16 = arith.constant 0 : index
    %c0_17 = arith.constant 0 : index
    %64 = vector.load %arg6[%c0_16, %c0_17] : memref<32x8xbf16, #tpu.memory_space<vmem>>, vector<32x8xbf16>
    %65 = arith.truncf %63 : vector<8x256xf32> to vector<8x256xbf16>
    %cst_18 = arith.constant dense<0.000000e+00> : vector<32x256xf32>
    %66 = tpu.matmul %64, %65, %cst_18 {dimension_numbers = #tpu.dot_dimension_numbers<[1], [0], [0], [1], [0, 0, 1, 1], [], []>} : vector<32x8xbf16>, vector<8x256xbf16>, vector<32x256xf32> -> vector<32x256xf32>
    %c0_19 = arith.constant 0 : index
    %c0_20 = arith.constant 0 : index
    %67 = vector.load %arg7[%c0_19, %c0_20] : memref<32x1xf32, #tpu.memory_space<vmem>>, vector<32x1xf32>
    %68 = vector.broadcast %67 : vector<32x1xf32> to vector<32x256xf32>
    %69 = arith.addf %66, %68 : vector<32x256xf32>
    %c0_21 = arith.constant 0 : index
    %c0_22 = arith.constant 0 : index
    %70 = vector.load %arg11[%c0_21, %c0_22] : memref<1x256xf32, #tpu.memory_space<vmem>>, vector<1x256xf32>
    %71 = vector.broadcast %70 : vector<1x256xf32> to vector<32x256xf32>
    %72 = arith.mulf %69, %71 : vector<32x256xf32>
    %cst_23 = arith.constant dense<0.000000e+00> : vector<32xf32>
    %73 = vector.multi_reduction <add>, %72, %cst_23 [1] : vector<32x256xf32> to vector<32xf32>
    %74 = vector.shape_cast %73 : vector<32xf32> to vector<32x1xf32>
    %c0_24 = arith.constant 0 : index
    %c0_25 = arith.constant 0 : index
    %75 = vector.load %arg8[%c0_24, %c0_25] : memref<8x32xbf16, #tpu.memory_space<vmem>>, vector<8x32xbf16>
    %76 = arith.truncf %74 : vector<32x1xf32> to vector<32x1xbf16>
    %cst_26 = arith.constant dense<0.000000e+00> : vector<8x1xf32>
    %77 = tpu.matmul %75, %76, %cst_26 {dimension_numbers = #tpu.dot_dimension_numbers<[1], [0], [0], [1], [0, 0, 1, 1], [], []>} : vector<8x32xbf16>, vector<32x1xbf16>, vector<8x1xf32> -> vector<8x1xf32>
    %cst_27 = arith.constant 0.000000e+00 : f32
    %78 = vector.broadcast %cst_27 : f32 to vector<8x1xf32>
    %79 = arith.maximumf %77, %78 : vector<8x1xf32>
    %c0_28 = arith.constant 0 : index
    %c0_29 = arith.constant 0 : index
    %80 = vector.load %arg9[%c0_28, %c0_29] : memref<32x8xbf16, #tpu.memory_space<vmem>>, vector<32x8xbf16>
    %81 = arith.truncf %79 : vector<8x1xf32> to vector<8x1xbf16>
    %cst_30 = arith.constant dense<0.000000e+00> : vector<32x1xf32>
    %82 = tpu.matmul %80, %81, %cst_30 {dimension_numbers = #tpu.dot_dimension_numbers<[1], [0], [0], [1], [0, 0, 1, 1], [], []>} : vector<32x8xbf16>, vector<8x1xbf16>, vector<32x1xf32> -> vector<32x1xf32>
    %83 = arith.negf %82 : vector<32x1xf32>
    %84 = math.exp %83 : vector<32x1xf32>
    %cst_31 = arith.constant 1.000000e+00 : f32
    %85 = vector.broadcast %cst_31 : f32 to vector<32x1xf32>
    %86 = arith.addf %85, %84 : vector<32x1xf32>
    %87 = arith.divf %85, %86 : vector<32x1xf32>
    %88 = vector.broadcast %87 : vector<32x1xf32> to vector<32x256xf32>
    %89 = arith.mulf %69, %88 : vector<32x256xf32>
    %90 = arith.addf %89, %1 : vector<32x256xf32>
    %cst_32 = arith.constant 0.000000e+00 : f32
    %91 = vector.broadcast %cst_32 : f32 to vector<32x256xf32>
    %92 = arith.cmpf oge, %90, %91 : vector<32x256xf32>
    %93 = vector.broadcast %4 : f32 to vector<32x256xf32>
    %94 = arith.mulf %93, %90 : vector<32x256xf32>
    %95 = arith.select %92, %90, %94 : vector<32x256xi1>, vector<32x256xf32>
    %c0_33 = arith.constant 0 : index
    %c0_34 = arith.constant 0 : index
    %c0_35 = arith.constant 0 : index
    %96 = vector.load %arg13[%c0_33, %c0_34, %c0_35] : memref<1x32x256xf32, #tpu.memory_space<vmem>>, vector<1x32x256xf32>
    %97 = vector.shape_cast %96 : vector<1x32x256xf32> to vector<32x256xf32>
    %98 = vector.shape_cast %95 : vector<32x256xf32> to vector<1x32x256xf32>
    tpu.vector_store %arg13[%c0_33, %c0_34, %c0_35], %98 {strides = array<i32>} : memref<1x32x256xf32, #tpu.memory_space<vmem>>, vector<1x32x256xf32>,
    return
  }
  func.func @transform_0(%arg0: i32) -> (i32, i32, i32) {
    %c0_i32 = arith.constant 0 : i32
    %c0_i32_0 = arith.constant 0 : i32
    %c0_i32_1 = arith.constant 0 : i32
    return %arg0, %c0_i32, %c0_i32_0 : i32, i32, i32
  }
  func.func @transform_1(%arg0: i32) -> (i32, i32) {
    %c0_i32 = arith.constant 0 : i32
    %c0_i32_0 = arith.constant 0 : i32
    %c0_i32_1 = arith.constant 0 : i32
    return %c0_i32, %c0_i32_0 : i32, i32
  }
  func.func @transform_2(%arg0: i32) -> (i32, i32) {
    %c0_i32 = arith.constant 0 : i32
    %c0_i32_0 = arith.constant 0 : i32
    %c0_i32_1 = arith.constant 0 : i32
    return %c0_i32, %c0_i32_0 : i32, i32
  }
  func.func @transform_3(%arg0: i32) -> (i32, i32) {
    %c0_i32 = arith.constant 0 : i32
    %c0_i32_0 = arith.constant 0 : i32
    %c0_i32_1 = arith.constant 0 : i32
    return %c0_i32, %c0_i32_0 : i32, i32
  }
  func.func @transform_4(%arg0: i32) -> (i32, i32) {
    %c0_i32 = arith.constant 0 : i32
    %c0_i32_0 = arith.constant 0 : i32
    %c0_i32_1 = arith.constant 0 : i32
    return %c0_i32, %c0_i32_0 : i32, i32
  }
  func.func @transform_5(%arg0: i32) -> (i32, i32) {
    %c0_i32 = arith.constant 0 : i32
    %c0_i32_0 = arith.constant 0 : i32
    %c0_i32_1 = arith.constant 0 : i32
    return %c0_i32, %c0_i32_0 : i32, i32
  }
  func.func @transform_6(%arg0: i32) -> (i32, i32) {
    %c0_i32 = arith.constant 0 : i32
    %c0_i32_0 = arith.constant 0 : i32
    %c0_i32_1 = arith.constant 0 : i32
    return %c0_i32, %c0_i32_0 : i32, i32
  }
  func.func @transform_7(%arg0: i32) -> (i32, i32) {
    %c0_i32 = arith.constant 0 : i32
    %c0_i32_0 = arith.constant 0 : i32
    %c0_i32_1 = arith.constant 0 : i32
    return %c0_i32, %c0_i32_0 : i32, i32
  }
  func.func @transform_8(%arg0: i32) -> (i32, i32) {
    %c0_i32 = arith.constant 0 : i32
    %c0_i32_0 = arith.constant 0 : i32
    %c0_i32_1 = arith.constant 0 : i32
    return %c0_i32, %c0_i32_0 : i32, i32
  }
  func.func @transform_9(%arg0: i32) -> (i32, i32) {
    %c0_i32 = arith.constant 0 : i32
    %c0_i32_0 = arith.constant 0 : i32
    %c0_i32_1 = arith.constant 0 : i32
    return %c0_i32, %c0_i32_0 : i32, i32
  }
  func.func @transform_10(%arg0: i32) -> (i32, i32) {
    %c0_i32 = arith.constant 0 : i32
    %c0_i32_0 = arith.constant 0 : i32
    %c0_i32_1 = arith.constant 0 : i32
    return %c0_i32, %c0_i32_0 : i32, i32
  }
  func.func @transform_11(%arg0: i32) -> i32 {
    %c0_i32 = arith.constant 0 : i32
    %c0_i32_0 = arith.constant 0 : i32
    return %c0_i32 : i32
  }
  func.func @transform_12(%arg0: i32) -> (i32, i32, i32) {
    %c0_i32 = arith.constant 0 : i32
    %c0_i32_0 = arith.constant 0 : i32
    %c0_i32_1 = arith.constant 0 : i32
    return %arg0, %c0_i32, %c0_i32_0 : i32, i32, i32
  }
}

</mosaic_0001>

<llo_original>
// kernel: tpu_custom_call.1
$region0: #{tpu_custom_call.1}
  #allocation0 [shape = 'u32[]', space=smem, size = 0x4, offset = 0x4, fixed_abs, tag = 'smem constant byte address 0x4 - core index']
  #allocation1 [shape = 'u32[144,128]{1,0:T(1,128)}', space=vmem, size = 0x12000, scoped, tag = 'internal scratch']
  %s0 = inlined_call_operand.hbm [shape: f32[2,32,256], index: 0, kind: input, shape index: {}]
  %s1 = inlined_call_operand.vmem [shape: bf16[8,32], index: 1, kind: input, shape index: {}]
  %s2 = inlined_call_operand.vmem [shape: f32[8,1], index: 2, kind: input, shape index: {}]
  %s3 = inlined_call_operand.vmem [shape: bf16[8,72], index: 3, kind: input, shape index: {}]
  %s4 = inlined_call_operand.vmem [shape: f32[8,1], index: 4, kind: input, shape index: {}]
  %s5 = inlined_call_operand.vmem [shape: bf16[32,8], index: 5, kind: input, shape index: {}]
  %s6 = inlined_call_operand.vmem [shape: f32[32,1], index: 6, kind: input, shape index: {}]
  %s7 = inlined_call_operand.vmem [shape: bf16[8,32], index: 7, kind: input, shape index: {}]
  %s8 = inlined_call_operand.vmem [shape: bf16[32,8], index: 8, kind: input, shape index: {}]
  %s9 = inlined_call_operand.vmem [shape: f32[9,256], index: 9, kind: input, shape index: {}]
  %s10 = inlined_call_operand.vmem [shape: f32[1,256], index: 10, kind: input, shape index: {}]
  %s11 = inlined_call_operand.vmem [shape: f32[3], index: 11, kind: input, shape index: {}]
  %s12 = inlined_call_operand.hbm [shape: f32[2,32,256], index: 12, kind: output, shape index: {}]
  %s13 = sld [smem:[#allocation0]]
  $region89: #{tpu_custom_call.1} parent=0
    _
  %s15 = ssub.s32 1, %s13
  %s16 = scalar_select 0, %s15, %s13
  $region1: #{tpu_custom_call.1} parent=0
    #allocation2 [shape = 'u8[65536]{0}', space=vmem, size = 0x10000, scoped, tag = 'input window, operand 0']
    #allocation3 [shape = 's32[2]{0}', space=sflag, size = 0x8, scoped, tag = 'scoped memory for tpu_custom_call.1']
    #allocation4 [shape = 's32[2]{0}', space=sflag, size = 0x8, scoped, tag = 'scoped memory for tpu_custom_call.1']
    #allocation5 [shape = 's32[2]{0}', space=sflag, size = 0x8, scoped, tag = 'scoped memory for tpu_custom_call.1']
    #allocation6 [shape = 'u8[512]{0}', space=smem, size = 0x200, scoped, tag = 'input window, operand 11, single buffered']
    #allocation7 [shape = 'u8[65536]{0}', space=vmem, size = 0x10000, scoped, tag = 'output window, operand 0']
    %17 = vsyncpa [#allocation3], 0
    %s18 = scalar_lea.sflag [#allocation3], 1
    %19 = vsyncpa %s18, 0
    %20 = vsyncpa [#allocation5], 0
    %21 = vsyncpa [#allocation4], 0
    %s22 = scalar_lea.sflag [#allocation4], 1
    %23 = vsyncpa %s22, 0
    loop: start=0, step=1, limit=4
    $region2: #{tpu_custom_call.1} parent=1 // loop_pre_header
      _
    $region3: #{tpu_custom_call.1} parent=1 // loop_header
      %s25 = sphi 0, %s29
      %p26 = scmp.ge.s32.totalorder %s25, 4
      %s35 = sphi 0, %s37
      %s38 = sphi 0, %s35
      %s39 = sphi 0, %s38
      %s55 = sphi 0, %s39
      %s59 = sphi 0, %s59
      %s61 = sphi 0, %s59
      %s62 = sphi 0, %s61
      %s76 = sphi 0, %s62
      %s80 = sphi 0, %s80
      %s82 = sphi 0, %s80
      %s83 = sphi 0, %s82
      %s97 = sphi 0, %s83
      %s101 = sphi 0, %s101
      %s103 = sphi 0, %s101
      %s104 = sphi 0, %s103
      %s118 = sphi 0, %s104
      %s122 = sphi 0, %s122
      %s124 = sphi 0, %s122
      %s125 = sphi 0, %s124
      %s139 = sphi 0, %s125
      %s143 = sphi 0, %s143
      %s145 = sphi 0, %s143
      %s146 = sphi 0, %s145
      %s160 = sphi 0, %s146
      %s164 = sphi 0, %s164
      %s166 = sphi 0, %s164
      %s167 = sphi 0, %s166
      %s181 = sphi 0, %s167
      %s185 = sphi 0, %s185
      %s187 = sphi 0, %s185
      %s188 = sphi 0, %s187
      %s202 = sphi 0, %s188
      %s206 = sphi 0, %s206
      %s208 = sphi 0, %s206
      %s209 = sphi 0, %s208
      %s223 = sphi 0, %s209
      %s227 = sphi 0, %s227
      %s229 = sphi 0, %s227
      %s230 = sphi 0, %s229
      %s244 = sphi 0, %s230
      %s248 = sphi 0, %s248
      %s250 = sphi 0, %s248
      %s251 = sphi 0, %s250
      %s265 = sphi 0, %s251
      %s269 = sphi 0, %s269
      %s271 = sphi 0, %s269
      %s272 = sphi 0, %s271
      %s286 = sphi 0, %s272
      %s292 = sphi 0, %s294
      %s295 = sphi 0, %s292
      %s296 = sphi 0, %s295
      %s312 = sphi 0, %s296
    $region4: #{tpu_custom_call.1} parent=1 // loop_header_branch
      %28 = sbr.rel (%p26) target = $region8
    $region5: #{tpu_custom_call.1} parent=1 // loop_body
      %s30 = ssub.s32 %s25, 1
      %s31 = ssub.s32 %s25, 2
      %s32 = sadd.s32 %s25, 1
      %s33 = ssub.s32 %s25, %s32
      %p34 = scmp.eq.s32.totalorder %s33, 0
      %s36 = sadd.s32 %s35, 1
      %s37 = scalar_select %p34, %s35, %s36
      %p40 = pneg %p34
      %p41 = scmp.eq.s32.totalorder %s25, 1
      %p42 = por %p40, %p41
      %p43 = scmp.ne.s32.totalorder %s35, %s38
      %p44 = scmp.eq.s32.totalorder %s25, 0
      %p45 = por %p43, %p44
      %p46 = scmp.ne.s32.totalorder %s35, %s38
      %p47 = scmp.eq.s32.totalorder %s30, 1
      %p48 = por %p46, %p47
      %p49 = scmp.ne.s32.totalorder %s38, %s39
      %p50 = scmp.eq.s32.totalorder %s30, 0
      %p51 = por %p49, %p50
      %p52 = scmp.ne.s32.totalorder %s38, %s39
      %p53 = scmp.eq.s32.totalorder %s31, 1
      %p54 = por %p52, %p53
      %p56 = scmp.ne.s32.totalorder %s39, %s55
      %p57 = scmp.eq.s32.totalorder %s31, 0
      %p58 = por %p56, %p57
      %s60 = sadd.s32 %s59, 1
      %p63 = scmp.eq.s32.totalorder %s25, 1
      %p64 = scmp.ne.s32.totalorder %s59, %s61
      %p65 = scmp.eq.s32.totalorder %s25, 0
      %p66 = por %p64, %p65
      %p67 = scmp.ne.s32.totalorder %s59, %s61
      %p68 = scmp.eq.s32.totalorder %s30, 1
      %p69 = por %p67, %p68
      %p70 = scmp.ne.s32.totalorder %s61, %s62
      %p71 = scmp.eq.s32.totalorder %s30, 0
      %p72 = por %p70, %p71
      %p73 = scmp.ne.s32.totalorder %s61, %s62
      %p74 = scmp.eq.s32.totalorder %s31, 1
      %p75 = por %p73, %p74
      %p77 = scmp.ne.s32.totalorder %s62, %s76
      %p78 = scmp.eq.s32.totalorder %s31, 0
      %p79 = por %p77, %p78
      %s81 = sadd.s32 %s80, 1
      %p84 = scmp.eq.s32.totalorder %s25, 1
      %p85 = scmp.ne.s32.totalorder %s80, %s82
      %p86 = scmp.eq.s32.totalorder %s25, 0
      %p87 = por %p85, %p86
      %p88 = scmp.ne.s32.totalorder %s80, %s82
      %p89 = scmp.eq.s32.totalorder %s30, 1
      %p90 = por %p88, %p89
      %p91 = scmp.ne.s32.totalorder %s82, %s83
      %p92 = scmp.eq.s32.totalorder %s30, 0
      %p93 = por %p91, %p92
      %p94 = scmp.ne.s32.totalorder %s82, %s83
      %p95 = scmp.eq.s32.totalorder %s31, 1
      %p96 = por %p94, %p95
      %p98 = scmp.ne.s32.totalorder %s83, %s97
      %p99 = scmp.eq.s32.totalorder %s31, 0
      %p100 = por %p98, %p99
      %s102 = sadd.s32 %s101, 1
      %p105 = scmp.eq.s32.totalorder %s25, 1
      %p106 = scmp.ne.s32.totalorder %s101, %s103
      %p107 = scmp.eq.s32.totalorder %s25, 0
      %p108 = por %p106, %p107
      %p109 = scmp.ne.s32.totalorder %s101, %s103
      %p110 = scmp.eq.s32.totalorder %s30, 1
      %p111 = por %p109, %p110
      %p112 = scmp.ne.s32.totalorder %s103, %s104
      %p113 = scmp.eq.s32.totalorder %s30, 0
      %p114 = por %p112, %p113
      %p115 = scmp.ne.s32.totalorder %s103, %s104
      %p116 = scmp.eq.s32.totalorder %s31, 1
      %p117 = por %p115, %p116
      %p119 = scmp.ne.s32.totalorder %s104, %s118
      %p120 = scmp.eq.s32.totalorder %s31, 0
      %p121 = por %p119, %p120
      %s123 = sadd.s32 %s122, 1
      %p126 = scmp.eq.s32.totalorder %s25, 1
      %p127 = scmp.ne.s32.totalorder %s122, %s124
      %p128 = scmp.eq.s32.totalorder %s25, 0
      %p129 = por %p127, %p128
      %p130 = scmp.ne.s32.totalorder %s122, %s124
      %p131 = scmp.eq.s32.totalorder %s30, 1
      %p132 = por %p130, %p131
      %p133 = scmp.ne.s32.totalorder %s124, %s125
      %p134 = scmp.eq.s32.totalorder %s30, 0
      %p135 = por %p133, %p134
      %p136 = scmp.ne.s32.totalorder %s124, %s125
      %p137 = scmp.eq.s32.totalorder %s31, 1
      %p138 = por %p136, %p137
      %p140 = scmp.ne.s32.totalorder %s125, %s139
      %p141 = scmp.eq.s32.totalorder %s31, 0
      %p142 = por %p140, %p141
      %s144 = sadd.s32 %s143, 1
      %p147 = scmp.eq.s32.totalorder %s25, 1
      %p148 = scmp.ne.s32.totalorder %s143, %s145
      %p149 = scmp.eq.s32.totalorder %s25, 0
      %p150 = por %p148, %p149
      %p151 = scmp.ne.s32.totalorder %s143, %s145
      %p152 = scmp.eq.s32.totalorder %s30, 1
      %p153 = por %p151, %p152
      %p154 = scmp.ne.s32.totalorder %s145, %s146
      %p155 = scmp.eq.s32.totalorder %s30, 0
      %p156 = por %p154, %p155
      %p157 = scmp.ne.s32.totalorder %s145, %s146
      %p158 = scmp.eq.s32.totalorder %s31, 1
      %p159 = por %p157, %p158
      %p161 = scmp.ne.s32.totalorder %s146, %s160
      %p162 = scmp.eq.s32.totalorder %s31, 0
      %p163 = por %p161, %p162
      %s165 = sadd.s32 %s164, 1
      %p168 = scmp.eq.s32.totalorder %s25, 1
      %p169 = scmp.ne.s32.totalorder %s164, %s166
      %p170 = scmp.eq.s32.totalorder %s25, 0
      %p171 = por %p169, %p170
      %p172 = scmp.ne.s32.totalorder %s164, %s166
      %p173 = scmp.eq.s32.totalorder %s30, 1
      %p174 = por %p172, %p173
      %p175 = scmp.ne.s32.totalorder %s166, %s167
      %p176 = scmp.eq.s32.totalorder %s30, 0
      %p177 = por %p175, %p176
      %p178 = scmp.ne.s32.totalorder %s166, %s167
      %p179 = scmp.eq.s32.totalorder %s31, 1
      %p180 = por %p178, %p179
      %p182 = scmp.ne.s32.totalorder %s167, %s181
      %p183 = scmp.eq.s32.totalorder %s31, 0
      %p184 = por %p182, %p183
      %s186 = sadd.s32 %s185, 1
      %p189 = scmp.eq.s32.totalorder %s25, 1
      %p190 = scmp.ne.s32.totalorder %s185, %s187
      %p191 = scmp.eq.s32.totalorder %s25, 0
      %p192 = por %p190, %p191
      %p193 = scmp.ne.s32.totalorder %s185, %s187
      %p194 = scmp.eq.s32.totalorder %s30, 1
      %p195 = por %p193, %p194
      %p196 = scmp.ne.s32.totalorder %s187, %s188
      %p197 = scmp.eq.s32.totalorder %s30, 0
      %p198 = por %p196, %p197
      %p199 = scmp.ne.s32.totalorder %s187, %s188
      %p200 = scmp.eq.s32.totalorder %s31, 1
      %p201 = por %p199, %p200
      %p203 = scmp.ne.s32.totalorder %s188, %s202
      %p204 = scmp.eq.s32.totalorder %s31, 0
      %p205 = por %p203, %p204
      %s207 = sadd.s32 %s206, 1
      %p210 = scmp.eq.s32.totalorder %s25, 1
      %p211 = scmp.ne.s32.totalorder %s206, %s208
      %p212 = scmp.eq.s32.totalorder %s25, 0
      %p213 = por %p211, %p212
      %p214 = scmp.ne.s32.totalorder %s206, %s208
      %p215 = scmp.eq.s32.totalorder %s30, 1
      %p216 = por %p214, %p215
      %p217 = scmp.ne.s32.totalorder %s208, %s209
      %p218 = scmp.eq.s32.totalorder %s30, 0
      %p219 = por %p217, %p218
      %p220 = scmp.ne.s32.totalorder %s208, %s209
      %p221 = scmp.eq.s32.totalorder %s31, 1
      %p222 = por %p220, %p221
      %p224 = scmp.ne.s32.totalorder %s209, %s223
      %p225 = scmp.eq.s32.totalorder %s31, 0
      %p226 = por %p224, %p225
      %s228 = sadd.s32 %s227, 1
      %p231 = scmp.eq.s32.totalorder %s25, 1
      %p232 = scmp.ne.s32.totalorder %s227, %s229
      %p233 = scmp.eq.s32.totalorder %s25, 0
      %p234 = por %p232, %p233
      %p235 = scmp.ne.s32.totalorder %s227, %s229
      %p236 = scmp.eq.s32.totalorder %s30, 1
      %p237 = por %p235, %p236
      %p238 = scmp.ne.s32.totalorder %s229, %s230
      %p239 = scmp.eq.s32.totalorder %s30, 0
      %p240 = por %p238, %p239
      %p241 = scmp.ne.s32.totalorder %s229, %s230
      %p242 = scmp.eq.s32.totalorder %s31, 1
      %p243 = por %p241, %p242
      %p245 = scmp.ne.s32.totalorder %s230, %s244
      %p246 = scmp.eq.s32.totalorder %s31, 0
      %p247 = por %p245, %p246
      %s249 = sadd.s32 %s248, 1
      %p252 = scmp.eq.s32.totalorder %s25, 1
      %p253 = scmp.ne.s32.totalorder %s248, %s250
      %p254 = scmp.eq.s32.totalorder %s25, 0
      %p255 = por %p253, %p254
      %p256 = scmp.ne.s32.totalorder %s248, %s250
      %p257 = scmp.eq.s32.totalorder %s30, 1
      %p258 = por %p256, %p257
      %p259 = scmp.ne.s32.totalorder %s250, %s251
      %p260 = scmp.eq.s32.totalorder %s30, 0
      %p261 = por %p259, %p260
      %p262 = scmp.ne.s32.totalorder %s250, %s251
      %p263 = scmp.eq.s32.totalorder %s31, 1
      %p264 = por %p262, %p263
      %p266 = scmp.ne.s32.totalorder %s251, %s265
      %p267 = scmp.eq.s32.totalorder %s31, 0
      %p268 = por %p266, %p267
      %s270 = sadd.s32 %s269, 1
      %p273 = scmp.eq.s32.totalorder %s25, 1
      %p274 = scmp.ne.s32.totalorder %s269, %s271
      %p275 = scmp.eq.s32.totalorder %s25, 0
      %p276 = por %p274, %p275
      %p277 = scmp.ne.s32.totalorder %s269, %s271
      %p278 = scmp.eq.s32.totalorder %s30, 1
      %p279 = por %p277, %p278
      %p280 = scmp.ne.s32.totalorder %s271, %s272
      %p281 = scmp.eq.s32.totalorder %s30, 0
      %p282 = por %p280, %p281
      %p283 = scmp.ne.s32.totalorder %s271, %s272
      %p284 = scmp.eq.s32.totalorder %s31, 1
      %p285 = por %p283, %p284
      %p287 = scmp.ne.s32.totalorder %s272, %s286
      %p288 = scmp.eq.s32.totalorder %s31, 0
      %p289 = por %p287, %p288
      %s290 = ssub.s32 %s25, %s32
      %p291 = scmp.eq.s32.totalorder %s290, 0
      %s293 = sadd.s32 %s292, 1
      %s294 = scalar_select %p291, %s292, %s293
      %p297 = pneg %p291
      %p298 = scmp.eq.s32.totalorder %s25, 1
      %p299 = por %p297, %p298
      %p300 = scmp.ne.s32.totalorder %s292, %s295
      %p301 = scmp.eq.s32.totalorder %s25, 0
      %p302 = por %p300, %p301
      %p303 = scmp.ne.s32.totalorder %s292, %s295
      %p304 = scmp.eq.s32.totalorder %s30, 1
      %p305 = por %p303, %p304
      %p306 = scmp.ne.s32.totalorder %s295, %s296
      %p307 = scmp.eq.s32.totalorder %s30, 0
      %p308 = por %p306, %p307
      %p309 = scmp.ne.s32.totalorder %s295, %s296
      %p310 = scmp.eq.s32.totalorder %s31, 1
      %p311 = por %p309, %p310
      %p313 = scmp.ne.s32.totalorder %s296, %s312
      %p314 = scmp.eq.s32.totalorder %s31, 0
      %p315 = por %p313, %p314
      %p316 = scmp.le.s32.totalorder 1, %s25
      %p317 = scmp.lt.s32.totalorder %s25, 3
      %p318 = pnand %p316, %p317
      %p319 = pneg %p318
      // Predicated region
      $region9: #{tpu_custom_call.1} parent=5 // pred_check
        _
      $region10: #{tpu_custom_call.1} parent=5 // pred_check_branch
        %321 = sbr.rel (%p318) target = $region12
      $region11: #{tpu_custom_call.1} parent=5 // pred_region
        %s322 = ssub.s32 %s25, 1
        // Predicated region
        $region13: #{tpu_custom_call.1} parent=11 // pred_check
          %p323 = pneg %p72
        $region14: #{tpu_custom_call.1} parent=11 // pred_check_branch
          %325 = sbr.rel (%p323) target = $region16
        $region15: #{tpu_custom_call.1} parent=11 // pred_region
          _
        $region16: #{tpu_custom_call.1} parent=11 // pred_fallthru
          _
        // Predicated region
        $region17: #{tpu_custom_call.1} parent=11 // pred_check
          %p326 = pneg %p93
        $region18: #{tpu_custom_call.1} parent=11 // pred_check_branch
          %328 = sbr.rel (%p326) target = $region20
        $region19: #{tpu_custom_call.1} parent=11 // pred_region
          _
        $region20: #{tpu_custom_call.1} parent=11 // pred_fallthru
          _
        // Predicated region
        $region21: #{tpu_custom_call.1} parent=11 // pred_check
          %p329 = pneg %p114
        $region22: #{tpu_custom_call.1} parent=11 // pred_check_branch
          %331 = sbr.rel (%p329) target = $region24
        $region23: #{tpu_custom_call.1} parent=11 // pred_region
          _
        $region24: #{tpu_custom_call.1} parent=11 // pred_fallthru
          _
        // Predicated region
        $region25: #{tpu_custom_call.1} parent=11 // pred_check
          %p332 = pneg %p135
        $region26: #{tpu_custom_call.1} parent=11 // pred_check_branch
          %334 = sbr.rel (%p332) target = $region28
        $region27: #{tpu_custom_call.1} parent=11 // pred_region
          _
        $region28: #{tpu_custom_call.1} parent=11 // pred_fallthru
          _
        // Predicated region
        $region29: #{tpu_custom_call.1} parent=11 // pred_check
          %p335 = pneg %p156
        $region30: #{tpu_custom_call.1} parent=11 // pred_check_branch
          %337 = sbr.rel (%p335) target = $region32
        $region31: #{tpu_custom_call.1} parent=11 // pred_region
          _
        $region32: #{tpu_custom_call.1} parent=11 // pred_fallthru
          _
        // Predicated region
        $region33: #{tpu_custom_call.1} parent=11 // pred_check
          %p338 = pneg %p177
        $region34: #{tpu_custom_call.1} parent=11 // pred_check_branch
          %340 = sbr.rel (%p338) target = $region36
        $region35: #{tpu_custom_call.1} parent=11 // pred_region
          _
        $region36: #{tpu_custom_call.1} parent=11 // pred_fallthru
          _
        // Predicated region
        $region37: #{tpu_custom_call.1} parent=11 // pred_check
          %p341 = pneg %p198
        $region38: #{tpu_custom_call.1} parent=11 // pred_check_branch
          %343 = sbr.rel (%p341) target = $region40
        $region39: #{tpu_custom_call.1} parent=11 // pred_region
          _
        $region40: #{tpu_custom_call.1} parent=11 // pred_fallthru
          _
        // Predicated region
        $region41: #{tpu_custom_call.1} parent=11 // pred_check
          %p344 = pneg %p219
        $region42: #{tpu_custom_call.1} parent=11 // pred_check_branch
          %346 = sbr.rel (%p344) target = $region44
        $region43: #{tpu_custom_call.1} parent=11 // pred_region
          _
        $region44: #{tpu_custom_call.1} parent=11 // pred_fallthru
          _
        // Predicated region
        $region45: #{tpu_custom_call.1} parent=11 // pred_check
          %p347 = pneg %p240
        $region46: #{tpu_custom_call.1} parent=11 // pred_check_branch
          %349 = sbr.rel (%p347) target = $region48
        $region47: #{tpu_custom_call.1} parent=11 // pred_region
          _
        $region48: #{tpu_custom_call.1} parent=11 // pred_fallthru
          _
        // Predicated region
        $region49: #{tpu_custom_call.1} parent=11 // pred_check
          %p350 = pneg %p261
        $region50: #{tpu_custom_call.1} parent=11 // pred_check_branch
          %352 = sbr.rel (%p350) target = $region52
        $region51: #{tpu_custom_call.1} parent=11 // pred_region
          _
        $region52: #{tpu_custom_call.1} parent=11 // pred_fallthru
          _
        // Predicated region
        $region53: #{tpu_custom_call.1} parent=11 // pred_check
          %p353 = pneg %p282
        $region54: #{tpu_custom_call.1} parent=11 // pred_check_branch
          %355 = sbr.rel (%p353) target = $region56
        $region55: #{tpu_custom_call.1} parent=11 // pred_region
          %s357 = ssub.s32 16, 16
          %358 = vsyncadd [#allocation5], %s357
          %s360 = sshll.u32 %s11, 4
          %s361 = int_to_ptr.vmem [resolvable:$true] %s360
          %363 = dma.vmem_to_smem %s361, 16, [#allocation6], [#allocation5]
        $region56: #{tpu_custom_call.1} parent=11 // pred_fallthru
          _
      $region12: #{tpu_custom_call.1} parent=5 // pred_fallthru
        _
      %p364 = scmp.lt.s32.totalorder %s25, 2
      // Predicated region
      $region57: #{tpu_custom_call.1} parent=5 // pred_check
        %p365 = pneg %p364
      $region58: #{tpu_custom_call.1} parent=5 // pred_check_branch
        %367 = sbr.rel (%p365) target = $region60
      $region59: #{tpu_custom_call.1} parent=5 // pred_region
        // Predicated region
        $region61: #{tpu_custom_call.1} parent=59 // pred_check
          %p368 = pneg %p45
        $region62: #{tpu_custom_call.1} parent=59 // pred_check_branch
          %370 = sbr.rel (%p368) target = $region64
        $region63: #{tpu_custom_call.1} parent=59 // pred_region
          %s371 = sand.u32 %s35, 1
          %s372 = scalar_lea.sflag [#allocation3], %s371
          %s373 = sand.u32 %s35, 1
          %s374 = smul.addr %s373, 64
          %s375 = scalar_lea.vmem [#allocation2], %s374
          %s377 = ssub.s32 1024, 1024
          %378 = vsyncadd %s372, %s377
          %s379 = smul.addr %s25, 8
          %s380 = smul.addr %s379, 128
          %s381 = scalar_lea.hbm %s0, %s380
          %s382 = sshll.u32 %s375, 4
          %s383 = int_to_ptr.vmem [resolvable:$true] %s382
          %388 = dma.hbm_to_vmem [thread:$0]  %s381, 1024, %s383, %s372, 256, 256, 16
        $region64: #{tpu_custom_call.1} parent=59 // pred_fallthru
          _
      $region60: #{tpu_custom_call.1} parent=5 // pred_fallthru
        _
      %p389 = scmp.le.s32.totalorder 1, %s25
      %p390 = scmp.lt.s32.totalorder %s25, 3
      %p391 = pnand %p389, %p390
      %p392 = pneg %p391
      // Predicated region
      $region65: #{tpu_custom_call.1} parent=5 // pred_check
        _
      $region66: #{tpu_custom_call.1} parent=5 // pred_check_branch
        %394 = sbr.rel (%p391) target = $region68
      $region67: #{tpu_custom_call.1} parent=5 // pred_region
        %s395 = ssub.s32 %s25, 1
        %s396 = sand.u32 %s38, 1
        %s397 = scalar_lea.sflag [#allocation3], %s396
        %s398 = sand.u32 %s38, 1
        %s399 = smul.addr %s398, 64
        %s400 = scalar_lea.vmem [#allocation2], %s399
        // Predicated region
        $region69: #{tpu_custom_call.1} parent=67 // pred_check
          %p401 = pneg %p51
        $region70: #{tpu_custom_call.1} parent=67 // pred_check_branch
          %403 = sbr.rel (%p401) target = $region72
        $region71: #{tpu_custom_call.1} parent=67 // pred_region
          %404 = dma.done %s397, 1024
        $region72: #{tpu_custom_call.1} parent=67 // pred_fallthru
          _
        // Predicated region
        $region73: #{tpu_custom_call.1} parent=67 // pred_check
          %p405 = pneg %p282
        $region74: #{tpu_custom_call.1} parent=67 // pred_check_branch
          %407 = sbr.rel (%p405) target = $region76
        $region75: #{tpu_custom_call.1} parent=67 // pred_region
          %408 = dma.done [#allocation5], 16
        $region76: #{tpu_custom_call.1} parent=67 // pred_fallthru
          _
        %409 = sfence
        %s410 = sand.u32 %s38, 1
        %s411 = scalar_lea.sflag [#allocation3], %s410
        %s412 = sand.u32 %s38, 1
        %s413 = smul.addr %s412, 64
        %s414 = scalar_lea.vmem [#allocation2], %s413
        %p415 = pneg %p51
        %p416 = pneg %p48
        %p417 = pneg %p72
        %p418 = pneg %p69
        %p419 = pneg %p93
        %p420 = pneg %p90
        %p421 = pneg %p114
        %p422 = pneg %p111
        %p423 = pneg %p135
        %p424 = pneg %p132
        %p425 = pneg %p156
        %p426 = pneg %p153
        %p427 = pneg %p177
        %p428 = pneg %p174
        %p429 = pneg %p198
        %p430 = pneg %p195
        %p431 = pneg %p219
        %p432 = pneg %p216
        %p433 = pneg %p240
        %p434 = pneg %p237
        %p435 = pneg %p261
        %p436 = pneg %p258
        %p437 = pneg %p282
        %p438 = pneg %p279
        %p439 = pneg %p308
        %p440 = pneg %p305
        %s441 = sand.u32 %s295, 1
        %s442 = scalar_lea.sflag [#allocation4], %s441
        %s443 = sand.u32 %s295, 1
        %s444 = smul.addr %s443, 64
        %s445 = scalar_lea.vmem [#allocation7], %s444
        %v447 = vld [vmem:[%s400] sm:$0xff]
        %v448 = vld [vmem:[%s400 + $0x8] sm:$0xff]
        %v449 = vld [vmem:[%s400 + $0x10] sm:$0xff]
        %v450 = vld [vmem:[%s400 + $0x18] sm:$0xff]
        %v451 = vld [vmem:[%s400 + $0x20] sm:$0xff]
        %v452 = vld [vmem:[%s400 + $0x28] sm:$0xff]
        %v453 = vld [vmem:[%s400 + $0x30] sm:$0xff]
        %v454 = vld [vmem:[%s400 + $0x38] sm:$0xff]
        %s455 = sld [smem:[#allocation6]]
        %s456 = sld [smem:[#allocation6 + $0x1]]
        %s457 = sld [smem:[#allocation6 + $0x2]]
        %v458 = vld [vmem:[%s1] sm:$0xf]
        %v459 = vpack.c.bf16 %v449, %v447
        %v460 = vpack.c.bf16 %v450, %v448
        %v461 = vpack.c.bf16 %v453, %v451
        %v462 = vpack.c.bf16 %v454, %v452
        %v463 = vld [vmem:[%s2] sm:$0xff]
        %465 = vset.pattern.permute.xlu0 0
        %466 = vperm.xlu0 %465, %v463
        %v467 = vpop.permute.xlu0 %466
        %vm469 = vcmask 261120
        %v471 = vsel %vm469, %v458, 0
        %473 = vmatprep.subr.bf16.mxu0 0
        %474 = vmatpush1.bf16.msra.mxu0 0
        %475 = vmatprep.subr.bf16.mxu0 0
        %476 = vmatpush1.bf16.msra.mxu0 0
        %477 = vmatprep.subr.bf16.mxu0 0
        %478 = vmatpush1.bf16.msra.mxu0 0
        %479 = vmatprep.subr.bf16.mxu0 0
        %480 = vmatpush1.bf16.msra.mxu0 0
        %481 = vmatprep.subr.bf16.mxu0 0
        %482 = vmatpush1.bf16.msra.mxu0 0
        %483 = vmatprep.subr.bf16.mxu0 0
        %484 = vmatpush1.bf16.msra.mxu0 0
        %485 = vmatprep.subr.bf16.mxu0 %v462
        %486 = vmatpush1.bf16.msra.mxu0 %v461
        %487 = vmatprep.subr.bf16.mxu0 %v460
        %488 = vmatpush1.bf16.msra.mxu0 %v459
        %489 = vmatprep.subr.bf16.mxu0 0
        %490 = vmatpush2.bf16.msra.mxu0 0
        %491 = vmatprep.subr.bf16.mxu0 0
        %492 = vmatpush2.bf16.msra.mxu0 0
        %493 = vmatprep.subr.bf16.mxu0 0
        %494 = vmatpush2.bf16.msra.mxu0 0
        %495 = vmatprep.subr.bf16.mxu0 0
        %496 = vmatpush2.bf16.msra.mxu0 0
        %497 = vmatprep.subr.bf16.mxu0 0
        %498 = vmatpush2.bf16.msra.mxu0 0
        %499 = vmatprep.subr.bf16.mxu0 0
        %500 = vmatpush2.bf16.msra.mxu0 0
        %501 = vmatprep.subr.bf16.mxu0 0
        %502 = vmatpush2.bf16.msra.mxu0 0
        %503 = vmatprep.subr.bf16.mxu0 0
        %504 = vmatpush2.bf16.msra.mxu0 0
        %505 = vmatprep.mubr.bf16.mxu0 0
        %506 = vmatmul.mubr.bf16.gmra.mxu0 %v471
        %v507 = vpop.f32.mrf.mxu0
        %v508 = vadd.f32 %v467, %v507
        %v509 = vpop.f32.mrf.mxu0
        %v510 = vadd.f32 %v467, %v509
        %v511 = vpop.f32.mrf.mxu0
        %v512 = vpop.f32.mrf.mxu0
        %513 = vdwg.mxu0
        %vm514 = vcmp.ge.f32.partialorder %v508, 0.0
        %vm515 = vcmp.ge.f32.partialorder %v510, 0.0
        %v516 = vstv %s455
        %v517 = vmul.f32 %v516, %v508
        %v518 = vmul.f32 %v516, %v510
        %v519 = vsel %vm514, %v508, %v517
        %v520 = vsel %vm515, %v510, %v518
        %v521 = vld [vmem:[%s9] sm:$0xff]
        %v522 = vld [vmem:[%s9 + $0x8] sm:$0xff]
        %v523 = vld [vmem:[%s9 + $0x10] sm:$0x1]
        %v524 = vld [vmem:[%s9 + $0x18] sm:$0x1]
        %525 = vrot.lane.b32.xlu0 %v519, 17
        %v526 = vpop.permute.xlu0 %525
        %527 = vrot.lane.b32.xlu0 %v520, 17
        %v528 = vpop.permute.xlu0 %527
        %v529 = vlaneseq
        %v530 = vand.u32 %v529, 127
        %vm531 = vcmp.lt.s32.totalorder %v530, 17
        %v532 = vsel %vm531, %v526, %v528
        %v533 = vsel %vm531, %v528, %v526
        %v534 = vlaneseq
        %v535 = vshrl.u32 %v534, 7
        %v536 = vsub.s32 0, %v535
        %v537 = vrot.slane %v521, %v536
        %v538 = vlaneseq
        %v539 = vshrl.u32 %v538, 7
        %v540 = vsub.s32 0, %v539
        %v541 = vrot.slane %v522, %v540
        %v542 = vmul.f32 %v533, %v537
        %v543 = vmul.f32 %v532, %v541
        %544 = vrot.lane.b32.xlu0 %v519, 16
        %v545 = vpop.permute.xlu0 %544
        %546 = vrot.lane.b32.xlu0 %v520, 16
        %v547 = vpop.permute.xlu0 %546
        %vm548 = vcmp.lt.s32.totalorder %v530, 16
        %v549 = vsel %vm548, %v545, %v547
        %v550 = vsel %vm548, %v547, %v545
        %v551 = vlaneseq
        %v552 = vshrl.u32 %v551, 7
        %v553 = vsub.s32 1, %v552
        %v554 = vrot.slane %v521, %v553
        %v555 = vlaneseq
        %v556 = vshrl.u32 %v555, 7
        %v557 = vsub.s32 1, %v556
        %v558 = vrot.slane %v522, %v557
        %v559 = vmul.f32 %v550, %v554
        %v560 = vmul.f32 %v549, %v558
        %561 = vrot.lane.b32.xlu0 %v519, 15
        %v562 = vpop.permute.xlu0 %561
        %563 = vrot.lane.b32.xlu0 %v520, 15
        %v564 = vpop.permute.xlu0 %563
        %vm565 = vcmp.lt.s32.totalorder %v530, 15
        %v566 = vsel %vm565, %v562, %v564
        %v567 = vsel %vm565, %v564, %v562
        %v568 = vlaneseq
        %v569 = vshrl.u32 %v568, 7
        %v570 = vsub.s32 2, %v569
        %v571 = vrot.slane %v521, %v570
        %v572 = vlaneseq
        %v573 = vshrl.u32 %v572, 7
        %v574 = vsub.s32 2, %v573
        %v575 = vrot.slane %v522, %v574
        %v576 = vmul.f32 %v567, %v571
        %v577 = vmul.f32 %v566, %v575
        %578 = vrot.lane.b32.xlu0 %v519, 1
        %v579 = vpop.permute.xlu0 %578
        %580 = vrot.lane.b32.xlu0 %v520, 1
        %v581 = vpop.permute.xlu0 %580
        %vm582 = vcmp.lt.s32.totalorder %v530, 1
        %v583 = vsel %vm582, %v579, %v581
        %v584 = vsel %vm582, %v581, %v579
        %v585 = vlaneseq
        %v586 = vshrl.u32 %v585, 7
        %v587 = vsub.s32 3, %v586
        %v588 = vrot.slane %v521, %v587
        %v589 = vlaneseq
        %v590 = vshrl.u32 %v589, 7
        %v591 = vsub.s32 3, %v590
        %v592 = vrot.slane %v522, %v591
        %v593 = vmul.f32 %v584, %v588
        %v594 = vmul.f32 %v583, %v592
        %v595 = vlaneseq
        %v596 = vshrl.u32 %v595, 7
        %v597 = vsub.s32 4, %v596
        %v598 = vrot.slane %v521, %v597
        %v599 = vlaneseq
        %v600 = vshrl.u32 %v599, 7
        %v601 = vsub.s32 4, %v600
        %v602 = vrot.slane %v522, %v601
        %v603 = vmul.f32 %v519, %v598
        %v604 = vmul.f32 %v520, %v602
        %605 = vrot.lane.b32.xlu0 %v519, 127
        %v606 = vpop.permute.xlu0 %605
        %607 = vrot.lane.b32.xlu0 %v520, 127
        %v608 = vpop.permute.xlu0 %607
        %vm609 = vcmp.lt.s32.totalorder %v530, 127
        %v610 = vsel %vm609, %v606, %v608
        %v611 = vsel %vm609, %v608, %v606
        %v612 = vlaneseq
        %v613 = vshrl.u32 %v612, 7
        %v614 = vsub.s32 5, %v613
        %v615 = vrot.slane %v521, %v614
        %v616 = vlaneseq
        %v617 = vshrl.u32 %v616, 7
        %v618 = vsub.s32 5, %v617
        %v619 = vrot.slane %v522, %v618
        %v620 = vmul.f32 %v610, %v615
        %v621 = vmul.f32 %v611, %v619
        %622 = vrot.lane.b32.xlu0 %v519, 113
        %v623 = vpop.permute.xlu0 %622
        %624 = vrot.lane.b32.xlu0 %v520, 113
        %v625 = vpop.permute.xlu0 %624
        %vm626 = vcmp.lt.s32.totalorder %v530, 113
        %v627 = vsel %vm626, %v623, %v625
        %v628 = vsel %vm626, %v625, %v623
        %v629 = vlaneseq
        %v630 = vshrl.u32 %v629, 7
        %v631 = vsub.s32 6, %v630
        %v632 = vrot.slane %v521, %v631
        %v633 = vlaneseq
        %v634 = vshrl.u32 %v633, 7
        %v635 = vsub.s32 6, %v634
        %v636 = vrot.slane %v522, %v635
        %v637 = vmul.f32 %v627, %v632
        %v638 = vmul.f32 %v628, %v636
        %639 = vrot.lane.b32.xlu0 %v519, 112
        %v640 = vpop.permute.xlu0 %639
        %641 = vrot.lane.b32.xlu0 %v520, 112
        %v642 = vpop.permute.xlu0 %641
        %vm643 = vcmp.lt.s32.totalorder %v530, 112
        %v644 = vsel %vm643, %v640, %v642
        %v645 = vsel %vm643, %v642, %v640
        %v646 = vlaneseq
        %v647 = vshrl.u32 %v646, 7
        %v648 = vsub.s32 7, %v647
        %v649 = vrot.slane %v521, %v648
        %v650 = vlaneseq
        %v651 = vshrl.u32 %v650, 7
        %v652 = vsub.s32 7, %v651
        %v653 = vrot.slane %v522, %v652
        %v654 = vmul.f32 %v644, %v649
        %v655 = vmul.f32 %v645, %v653
        %656 = vrot.lane.b32.xlu0 %v519, 111
        %v657 = vpop.permute.xlu0 %656
        %658 = vrot.lane.b32.xlu0 %v520, 111
        %v659 = vpop.permute.xlu0 %658
        %vm660 = vcmp.lt.s32.totalorder %v530, 111
        %v661 = vsel %vm660, %v657, %v659
        %v662 = vsel %vm660, %v659, %v657
        %v663 = vlaneseq
        %v664 = vshrl.u32 %v663, 7
        %v665 = vsub.s32 0, %v664
        %v666 = vrot.slane %v523, %v665
        %v667 = vlaneseq
        %v668 = vshrl.u32 %v667, 7
        %v669 = vsub.s32 0, %v668
        %v670 = vrot.slane %v524, %v669
        %v671 = vmul.f32 %v661, %v666
        %v672 = vmul.f32 %v662, %v670
        %v673 = vpack.c.bf16 %v559, %v542
        %v674 = vpack.c.bf16 %v560, %v543
        %v675 = vpack.c.bf16 %v593, %v576
        %v676 = vpack.c.bf16 %v594, %v577
        %v677 = vpack.c.bf16 %v620, %v603
        %v678 = vpack.c.bf16 %v621, %v604
        %v679 = vpack.c.bf16 %v654, %v637
        %v680 = vpack.c.bf16 %v655, %v638
        %v681 = vpack.c.bf16 %v671, %v671
        %v682 = vpack.c.bf16 %v672, %v672
        %v683 = vld [vmem:[%s3] sm:$0xf]
        %v684 = vld [vmem:[%s4] sm:$0xff]
        %686 = vset.pattern.permute.xlu0 0
        %687 = vperm.xlu0 %686, %v684
        %v688 = vpop.permute.xlu0 %687
        %vm690 = vcmask 588800
        %v692 = vsel %vm690, %v683, 0
        %vm694 = vcmask 1043456
        %v696 = vsel %vm694, %v681, 0
        %v699 = vsel %vm694, %v682, 0
        %701 = vmatprep.subr.bf16.mxu0 0
        %702 = vmatpush1.bf16.msra.mxu0 0
        %703 = vmatprep.subr.bf16.mxu0 0
        %704 = vmatpush1.bf16.msra.mxu0 0
        %705 = vmatprep.subr.bf16.mxu0 0
        %706 = vmatpush1.bf16.msra.mxu0 0
        %707 = vmatprep.subr.bf16.mxu0 %v699
        %708 = vmatpush1.bf16.msra.mxu0 %v696
        %709 = vmatprep.subr.bf16.mxu0 %v680
        %710 = vmatpush1.bf16.msra.mxu0 %v679
        %711 = vmatprep.subr.bf16.mxu0 %v678
        %712 = vmatpush1.bf16.msra.mxu0 %v677
        %713 = vmatprep.subr.bf16.mxu0 %v676
        %714 = vmatpush1.bf16.msra.mxu0 %v675
        %715 = vmatprep.subr.bf16.mxu0 %v674
        %716 = vmatpush1.bf16.msra.mxu0 %v673
        %717 = vmatprep.subr.bf16.mxu0 0
        %718 = vmatpush2.bf16.msra.mxu0 0
        %719 = vmatprep.subr.bf16.mxu0 0
        %720 = vmatpush2.bf16.msra.mxu0 0
        %721 = vmatprep.subr.bf16.mxu0 0
        %722 = vmatpush2.bf16.msra.mxu0 0
        %723 = vmatprep.subr.bf16.mxu0 0
        %724 = vmatpush2.bf16.msra.mxu0 0
        %725 = vmatprep.subr.bf16.mxu0 0
        %726 = vmatpush2.bf16.msra.mxu0 0
        %727 = vmatprep.subr.bf16.mxu0 0
        %728 = vmatpush2.bf16.msra.mxu0 0
        %729 = vmatprep.subr.bf16.mxu0 0
        %730 = vmatpush2.bf16.msra.mxu0 0
        %731 = vmatprep.subr.bf16.mxu0 0
        %732 = vmatpush2.bf16.msra.mxu0 0
        %733 = vmatprep.mubr.bf16.mxu0 0
        %734 = vmatmul.mubr.bf16.gmra.mxu0 %v692
        %v735 = vpop.f32.mrf.mxu0
        %v736 = vadd.f32 %v688, %v735
        %v737 = vpop.f32.mrf.mxu0
        %v738 = vadd.f32 %v688, %v737
        %v739 = vpop.f32.mrf.mxu0
        %v740 = vpop.f32.mrf.mxu0
        %741 = vdwg.mxu0
        %vm742 = vcmp.ge.f32.partialorder %v736, 0.0
        %vm743 = vcmp.ge.f32.partialorder %v738, 0.0
        %v744 = vstv %s456
        %v745 = vmul.f32 %v744, %v736
        %v746 = vmul.f32 %v744, %v738
        %v747 = vsel %vm742, %v736, %v745
        %v748 = vsel %vm743, %v738, %v746
        %v749 = vld [vmem:[%s5] sm:$0xf]
        %v750 = vld [vmem:[%s5 + $0x4] sm:$0xf]
        %v751 = vld [vmem:[%s5 + $0x8] sm:$0xf]
        %v752 = vld [vmem:[%s5 + $0xc] sm:$0xf]
        %v753 = vpack.c.bf16 %v747, %v747
        %v754 = vpack.c.bf16 %v748, %v748
        %v755 = vld [vmem:[%s6] sm:$0xff]
        %v756 = vld [vmem:[%s6 + $0x8] sm:$0xff]
        %v757 = vld [vmem:[%s6 + $0x10] sm:$0xff]
        %v758 = vld [vmem:[%s6 + $0x18] sm:$0xff]
        %760 = vset.pattern.permute.xlu0 0
        %761 = vperm.xlu0 %760, %v755
        %v762 = vpop.permute.xlu0 %761
        %765 = vset.pattern.permute.xlu0 0
        %766 = vperm.xlu0 %765, %v756
        %v767 = vpop.permute.xlu0 %766
        %770 = vset.pattern.permute.xlu0 0
        %771 = vperm.xlu0 %770, %v757
        %v772 = vpop.permute.xlu0 %771
        %775 = vset.pattern.permute.xlu0 0
        %776 = vperm.xlu0 %775, %v758
        %v777 = vpop.permute.xlu0 %776
        %v783 = vunpack.c.l.b16 %v749
        %v784 = vunpack.c.l.b16 %v750
        %v785 = vunpack.c.l.b16 %v751
        %v786 = vunpack.c.l.b16 %v752
        %v787 = vpack.c.b16 %v784, %v783
        %v788 = vpack.c.b16 %v786, %v785
        %vm789 = vcmask 64512
        %v791 = vsel %vm789, %v787, 0
        %v794 = vsel %vm789, %v788, 0
        %v797 = vsel %vm694, %v753, 0
        %v800 = vsel %vm694, %v754, 0
        %802 = vmatprep.subr.bf16.mxu0 0
        %803 = vmatpush1.bf16.msra.mxu0 0
        %804 = vmatprep.subr.bf16.mxu0 0
        %805 = vmatpush1.bf16.msra.mxu0 0
        %806 = vmatprep.subr.bf16.mxu0 0
        %807 = vmatpush1.bf16.msra.mxu0 0
        %808 = vmatprep.subr.bf16.mxu0 0
        %809 = vmatpush1.bf16.msra.mxu0 0
        %810 = vmatprep.subr.bf16.mxu0 0
        %811 = vmatpush1.bf16.msra.mxu0 0
        %812 = vmatprep.subr.bf16.mxu0 0
        %813 = vmatpush1.bf16.msra.mxu0 0
        %814 = vmatprep.subr.bf16.mxu0 0
        %815 = vmatpush1.bf16.msra.mxu0 0
        %816 = vmatprep.subr.bf16.mxu0 %v800
        %817 = vmatpush1.bf16.msra.mxu0 %v797
        %818 = vmatprep.subr.bf16.mxu0 0
        %819 = vmatpush2.bf16.msra.mxu0 0
        %820 = vmatprep.subr.bf16.mxu0 0
        %821 = vmatpush2.bf16.msra.mxu0 0
        %822 = vmatprep.subr.bf16.mxu0 0
        %823 = vmatpush2.bf16.msra.mxu0 0
        %824 = vmatprep.subr.bf16.mxu0 0
        %825 = vmatpush2.bf16.msra.mxu0 0
        %826 = vmatprep.subr.bf16.mxu0 0
        %827 = vmatpush2.bf16.msra.mxu0 0
        %828 = vmatprep.subr.bf16.mxu0 0
        %829 = vmatpush2.bf16.msra.mxu0 0
        %830 = vmatprep.subr.bf16.mxu0 0
        %831 = vmatpush2.bf16.msra.mxu0 0
        %832 = vmatprep.subr.bf16.mxu0 0
        %833 = vmatpush2.bf16.msra.mxu0 0
        %834 = vmatprep.mubr.bf16.mxu0 0
        %835 = vmatmul.mubr.bf16.gmra.mxu0 %v791
        %v836 = vpop.f32.mrf.mxu0
        %v837 = vadd.f32 %v762, %v836
        %v838 = vpop.f32.mrf.mxu0
        %v839 = vadd.f32 %v762, %v838
        %v840 = vpop.f32.mrf.mxu0
        %v841 = vadd.f32 %v767, %v840
        %v842 = vpop.f32.mrf.mxu0
        %v843 = vadd.f32 %v767, %v842
        %844 = vmatprep.mubr.bf16.mxu0 0
        %845 = vmatmul.mubr.bf16.gmra.mxu0 %v794
        %v846 = vpop.f32.mrf.mxu0
        %v847 = vadd.f32 %v772, %v846
        %v848 = vpop.f32.mrf.mxu0
        %v849 = vadd.f32 %v772, %v848
        %v850 = vpop.f32.mrf.mxu0
        %v851 = vadd.f32 %v777, %v850
        %v852 = vpop.f32.mrf.mxu0
        %v853 = vadd.f32 %v777, %v852
        %854 = vdwg.mxu0
        %v855 = vld [vmem:[%s10] sm:$0x3]
        %v857 = vlaneseq
        %v858 = vshrl.u32 %v857, 7
        %v859 = vsub.s32 0, %v858
        %v860 = vrot.slane %v855, %v859
        %v861 = vlaneseq
        %v862 = vshrl.u32 %v861, 7
        %v863 = vsub.s32 1, %v862
        %v864 = vrot.slane %v855, %v863
        %v867 = vmul.f32 %v837, %v860
        %v868 = vmul.f32 %v839, %v864
        %v869 = vmul.f32 %v841, %v860
        %v870 = vmul.f32 %v843, %v864
        %v871 = vmul.f32 %v847, %v860
        %v872 = vmul.f32 %v849, %v864
        %v873 = vmul.f32 %v851, %v860
        %v874 = vmul.f32 %v853, %v864
        %v875 = vadd.f32 %v867, %v868
        %876 = vadd.xlane.f32.xlu0 %v875
        %v877 = vpop.xlane.xlu0 %876
        %v878 = vadd.f32 %v869, %v870
        %879 = vadd.xlane.f32.xlu0 %v878
        %v880 = vpop.xlane.xlu0 %879
        %v881 = vadd.f32 %v871, %v872
        %882 = vadd.xlane.f32.xlu0 %v881
        %v883 = vpop.xlane.xlu0 %882
        %v884 = vadd.f32 %v873, %v874
        %885 = vadd.xlane.f32.xlu0 %v884
        %v886 = vpop.xlane.xlu0 %885
        %v887 = vld [vmem:[%s7] sm:$0xf]
        %v888 = vpack.c.bf16 %v880, %v877
        %v889 = vpack.c.bf16 %v886, %v883
        %v891 = vsel %vm469, %v887, 0
        %893 = vmatprep.subr.bf16.mxu0 0
        %894 = vmatpush1.bf16.msra.mxu0 0
        %895 = vmatprep.subr.bf16.mxu0 0
        %896 = vmatpush1.bf16.msra.mxu0 0
        %897 = vmatprep.subr.bf16.mxu0 0
        %898 = vmatpush1.bf16.msra.mxu0 0
        %899 = vmatprep.subr.bf16.mxu0 0
        %900 = vmatpush1.bf16.msra.mxu0 0
        %901 = vmatprep.subr.bf16.mxu0 0
        %902 = vmatpush1.bf16.msra.mxu0 0
        %903 = vmatprep.subr.bf16.mxu0 0
        %904 = vmatpush1.bf16.msra.mxu0 0
        %905 = vmatprep.subr.bf16.mxu0 0
        %906 = vmatpush1.bf16.msra.mxu0 %v889
        %907 = vmatprep.subr.bf16.mxu0 0
        %908 = vmatpush1.bf16.msra.mxu0 %v888
        %909 = vmatprep.subr.bf16.mxu0 0
        %910 = vmatpush2.bf16.msra.mxu0 0
        %911 = vmatprep.subr.bf16.mxu0 0
        %912 = vmatpush2.bf16.msra.mxu0 0
        %913 = vmatprep.subr.bf16.mxu0 0
        %914 = vmatpush2.bf16.msra.mxu0 0
        %915 = vmatprep.subr.bf16.mxu0 0
        %916 = vmatpush2.bf16.msra.mxu0 0
        %917 = vmatprep.subr.bf16.mxu0 0
        %918 = vmatpush2.bf16.msra.mxu0 0
        %919 = vmatprep.subr.bf16.mxu0 0
        %920 = vmatpush2.bf16.msra.mxu0 0
        %921 = vmatprep.subr.bf16.mxu0 0
        %922 = vmatpush2.bf16.msra.mxu0 0
        %923 = vmatprep.subr.bf16.mxu0 0
        %924 = vmatpush2.bf16.msra.mxu0 0
        %925 = vmatprep.mubr.bf16.mxu0 0
        %926 = vmatmul.mubr.bf16.gmra.mxu0 %v891
        %v927 = vpop.f32.mrf.mxu0
        %v928 = vadd.f32 0.0, %v927
        %v929 = vpop.f32.mrf.mxu0
        %v930 = vpop.f32.mrf.mxu0
        %v931 = vpop.f32.mrf.mxu0
        %932 = vdwg.mxu0
        %v933 = vmax.f32 %v928, 0.0
        %v934 = vld [vmem:[%s8] sm:$0xf]
        %v935 = vld [vmem:[%s8 + $0x4] sm:$0xf]
        %v936 = vld [vmem:[%s8 + $0x8] sm:$0xf]
        %v937 = vld [vmem:[%s8 + $0xc] sm:$0xf]
        %v938 = vpack.c.bf16 %v933, %v933
        %v943 = vunpack.c.l.b16 %v934
        %v944 = vunpack.c.l.b16 %v935
        %v945 = vunpack.c.l.b16 %v936
        %v946 = vunpack.c.l.b16 %v937
        %v947 = vpack.c.b16 %v944, %v943
        %v948 = vpack.c.b16 %v946, %v945
        %v950 = vsel %vm789, %v947, 0
        %v953 = vsel %vm789, %v948, 0
        %v956 = vsel %vm694, %v938, 0
        %958 = vmatprep.subr.bf16.mxu0 0
        %959 = vmatpush1.bf16.msra.mxu0 0
        %960 = vmatprep.subr.bf16.mxu0 0
        %961 = vmatpush1.bf16.msra.mxu0 0
        %962 = vmatprep.subr.bf16.mxu0 0
        %963 = vmatpush1.bf16.msra.mxu0 0
        %964 = vmatprep.subr.bf16.mxu0 0
        %965 = vmatpush1.bf16.msra.mxu0 0
        %966 = vmatprep.subr.bf16.mxu0 0
        %967 = vmatpush1.bf16.msra.mxu0 0
        %968 = vmatprep.subr.bf16.mxu0 0
        %969 = vmatpush1.bf16.msra.mxu0 0
        %970 = vmatprep.subr.bf16.mxu0 0
        %971 = vmatpush1.bf16.msra.mxu0 0
        %972 = vmatprep.subr.bf16.mxu0 0
        %973 = vmatpush1.bf16.msra.mxu0 %v956
        %974 = vmatprep.subr.bf16.mxu0 0
        %975 = vmatpush2.bf16.msra.mxu0 0
        %976 = vmatprep.subr.bf16.mxu0 0
        %977 = vmatpush2.bf16.msra.mxu0 0
        %978 = vmatprep.subr.bf16.mxu0 0
        %979 = vmatpush2.bf16.msra.mxu0 0
        %980 = vmatprep.subr.bf16.mxu0 0
        %981 = vmatpush2.bf16.msra.mxu0 0
        %982 = vmatprep.subr.bf16.mxu0 0
        %983 = vmatpush2.bf16.msra.mxu0 0
        %984 = vmatprep.subr.bf16.mxu0 0
        %985 = vmatpush2.bf16.msra.mxu0 0
        %986 = vmatprep.subr.bf16.mxu0 0
        %987 = vmatpush2.bf16.msra.mxu0 0
        %988 = vmatprep.subr.bf16.mxu0 0
        %989 = vmatpush2.bf16.msra.mxu0 0
        %990 = vmatprep.mubr.bf16.mxu0 0
        %991 = vmatmul.mubr.bf16.gmra.mxu0 %v950
        %v992 = vpop.f32.mrf.mxu0
        %v993 = vadd.f32 0.0, %v992
        %v994 = vpop.f32.mrf.mxu0
        %v995 = vpop.f32.mrf.mxu0
        %v996 = vadd.f32 0.0, %v995
        %v997 = vpop.f32.mrf.mxu0
        %998 = vmatprep.mubr.bf16.mxu0 0
        %999 = vmatmul.mubr.bf16.gmra.mxu0 %v953
        %v1000 = vpop.f32.mrf.mxu0
        %v1001 = vadd.f32 0.0, %v1000
        %v1002 = vpop.f32.mrf.mxu0
        %v1003 = vpop.f32.mrf.mxu0
        %v1004 = vadd.f32 0.0, %v1003
        %v1005 = vpop.f32.mrf.mxu0
        %1006 = vdwg.mxu0
        %v1007 = vxor.u32 %v993, 2147483648
        %v1008 = vxor.u32 %v996, 2147483648
        %v1009 = vxor.u32 %v1001, 2147483648
        %v1010 = vxor.u32 %v1004, 2147483648
        %v1011 = vmul.f32 %v1007, 1.442695
        %v1012 = vpow.pop %v1011
        %v1013 = vmul.f32 %v1008, 1.442695
        %v1014 = vpow.pop %v1013
        %v1015 = vmul.f32 %v1009, 1.442695
        %v1016 = vpow.pop %v1015
        %v1017 = vmul.f32 %v1010, 1.442695
        %v1018 = vpow.pop %v1017
        %v1019 = vadd.f32 %v1012, 1.0
        %v1020 = vadd.f32 %v1014, 1.0
        %v1021 = vadd.f32 %v1016, 1.0
        %v1022 = vadd.f32 %v1018, 1.0
        %v1023 = vrcp.pop %v1019
        %v1024 = vmul.f32 1.0, %v1023
        %v1025 = vrcp.pop %v1020
        %v1026 = vmul.f32 1.0, %v1025
        %v1027 = vrcp.pop %v1021
        %v1028 = vmul.f32 1.0, %v1027
        %v1029 = vrcp.pop %v1022
        %v1030 = vmul.f32 1.0, %v1029
        %1032 = vset.pattern.permute.xlu0 0
        %1033 = vperm.xlu0 %1032, %v1024
        %v1034 = vpop.permute.xlu0 %1033
        %1037 = vset.pattern.permute.xlu0 0
        %1038 = vperm.xlu0 %1037, %v1026
        %v1039 = vpop.permute.xlu0 %1038
        %1042 = vset.pattern.permute.xlu0 0
        %1043 = vperm.xlu0 %1042, %v1028
        %v1044 = vpop.permute.xlu0 %1043
        %1047 = vset.pattern.permute.xlu0 0
        %1048 = vperm.xlu0 %1047, %v1030
        %v1049 = vpop.permute.xlu0 %1048
        %v1051 = vmul.f32 %v837, %v1034
        %v1052 = vmul.f32 %v839, %v1034
        %v1053 = vmul.f32 %v841, %v1039
        %v1054 = vmul.f32 %v843, %v1039
        %v1055 = vmul.f32 %v847, %v1044
        %v1056 = vmul.f32 %v849, %v1044
        %v1057 = vmul.f32 %v851, %v1049
        %v1058 = vmul.f32 %v853, %v1049
        %v1059 = vadd.f32 %v1051, %v447
        %v1060 = vadd.f32 %v1052, %v448
        %v1061 = vadd.f32 %v1053, %v449
        %v1062 = vadd.f32 %v1054, %v450
        %v1063 = vadd.f32 %v1055, %v451
        %v1064 = vadd.f32 %v1056, %v452
        %v1065 = vadd.f32 %v1057, %v453
        %v1066 = vadd.f32 %v1058, %v454
        %vm1067 = vcmp.ge.f32.partialorder %v1059, 0.0
        %vm1068 = vcmp.ge.f32.partialorder %v1060, 0.0
        %vm1069 = vcmp.ge.f32.partialorder %v1061, 0.0
        %vm1070 = vcmp.ge.f32.partialorder %v1062, 0.0
        %vm1071 = vcmp.ge.f32.partialorder %v1063, 0.0
        %vm1072 = vcmp.ge.f32.partialorder %v1064, 0.0
        %vm1073 = vcmp.ge.f32.partialorder %v1065, 0.0
        %vm1074 = vcmp.ge.f32.partialorder %v1066, 0.0
        %v1075 = vstv %s457
        %v1076 = vmul.f32 %v1075, %v1059
        %v1077 = vmul.f32 %v1075, %v1060
        %v1078 = vmul.f32 %v1075, %v1061
        %v1079 = vmul.f32 %v1075, %v1062
        %v1080 = vmul.f32 %v1075, %v1063
        %v1081 = vmul.f32 %v1075, %v1064
        %v1082 = vmul.f32 %v1075, %v1065
        %v1083 = vmul.f32 %v1075, %v1066
        %v1084 = vsel %vm1067, %v1059, %v1076
        %v1085 = vsel %vm1068, %v1060, %v1077
        %v1086 = vsel %vm1069, %v1061, %v1078
        %v1087 = vsel %vm1070, %v1062, %v1079
        %v1088 = vsel %vm1071, %v1063, %v1080
        %v1089 = vsel %vm1072, %v1064, %v1081
        %v1090 = vsel %vm1073, %v1065, %v1082
        %v1091 = vsel %vm1074, %v1066, %v1083
        %1092 = vst [vmem:[%s445] sm:$0xff] %v1084
        %1093 = vst [vmem:[%s445 + $0x8] sm:$0xff] %v1085
        %1094 = vst [vmem:[%s445 + $0x10] sm:$0xff] %v1086
        %1095 = vst [vmem:[%s445 + $0x18] sm:$0xff] %v1087
        %1096 = vst [vmem:[%s445 + $0x20] sm:$0xff] %v1088
        %1097 = vst [vmem:[%s445 + $0x28] sm:$0xff] %v1089
        %1098 = vst [vmem:[%s445 + $0x30] sm:$0xff] %v1090
        %1099 = vst [vmem:[%s445 + $0x38] sm:$0xff] %v1091
        %s1100 = sand.u32 %s295, 1
        %s1101 = scalar_lea.sflag [#allocation4], %s1100
        %s1102 = sand.u32 %s295, 1
        %s1103 = smul.addr %s1102, 64
        %s1104 = scalar_lea.vmem [#allocation7], %s1103
        // Predicated region
        $region77: #{tpu_custom_call.1} parent=67 // pred_check
          %p1105 = pneg %p305
        $region78: #{tpu_custom_call.1} parent=67 // pred_check_branch
          %1107 = sbr.rel (%p1105) target = $region80
        $region79: #{tpu_custom_call.1} parent=67 // pred_region
          %s1109 = ssub.s32 1024, 1024
          %1110 = vsyncadd %s1101, %s1109
          %s1111 = smul.addr %s30, 8
          %s1112 = smul.addr %s1111, 128
          %s1113 = scalar_lea.hbm %s12, %s1112
          %s1114 = sshll.u32 %s1104, 4
          %s1115 = int_to_ptr.vmem [resolvable:$true] %s1114
          %1120 = dma.vmem_to_hbm [thread:$0]  %s1115, 1024, %s1113, %s1101, 256, 256, 16
        $region80: #{tpu_custom_call.1} parent=67 // pred_fallthru
          _
      $region68: #{tpu_custom_call.1} parent=5 // pred_fallthru
        _
      %p1121 = scmp.le.s32.totalorder 2, %s25
      // Predicated region
      $region81: #{tpu_custom_call.1} parent=5 // pred_check
        %p1122 = pneg %p1121
      $region82: #{tpu_custom_call.1} parent=5 // pred_check_branch
        %1124 = sbr.rel (%p1122) target = $region84
      $region83: #{tpu_custom_call.1} parent=5 // pred_region
        %s1125 = ssub.s32 %s25, 2
        // Predicated region
        $region85: #{tpu_custom_call.1} parent=83 // pred_check
          %p1126 = pneg %p311
        $region86: #{tpu_custom_call.1} parent=83 // pred_check_branch
          %1128 = sbr.rel (%p1126) target = $region88
        $region87: #{tpu_custom_call.1} parent=83 // pred_region
          %s1129 = sand.u32 %s296, 1
          %s1130 = scalar_lea.sflag [#allocation4], %s1129
          %s1131 = sand.u32 %s296, 1
          %s1132 = smul.addr %s1131, 64
          %s1133 = scalar_lea.vmem [#allocation7], %s1132
          %1134 = dma.done %s1130, 1024
        $region88: #{tpu_custom_call.1} parent=83 // pred_fallthru
          _
      $region84: #{tpu_custom_call.1} parent=5 // pred_fallthru
        _
    $region6: #{tpu_custom_call.1} parent=1 // loop_footer
      %s29 = sadd.s32 1, %s25
    $region7: #{tpu_custom_call.1} parent=1 // loop_footer_branch
      %24 = sbr.rel target = $region3
    $region8: #{tpu_custom_call.1} parent=1 // loop_exit
      _
    %1135 = vsyncpa [#allocation3], 1
    %s1136 = scalar_lea.sflag [#allocation3], 1
    %1137 = vsyncpa %s1136, 1
    %1138 = vsyncpa [#allocation4], 1
    %s1139 = scalar_lea.sflag [#allocation4], 1
    %1140 = vsyncpa %s1139, 1
    %1141 = vsyncpa [#allocation5], 1
    %s1142 = scalar_lea.sflag [#allocation5], 1
    %1143 = vsyncpa %s1142, 1

</llo_original>
